<compile_context>
chip_gen: v7x
topology: tpu7x:2x2x1
jax: 0.10.0
libtpu: 0.0.40
codegen_flags: <defaults>
</compile_context>

<pallas_src>
import functools

import jax
import jax.numpy as jnp
import numpy as np
from jax.experimental import pallas as pl
from jax.experimental.pallas import tpu as pltpu

# ----------------------- configuration (mirrors config.* fields) -----------------------
B = 2          # batch
S = 8          # seq_len
V = 64         # ntokens / vocab
E = 32         # emb_size
DT = 32        # distil_size
DP = 32        # disper_size
KT = 16        # distill_num  (distilling codebook entries / class_num)
KP = 8         # disper_num
H = 32         # decoder hidden
COMIT = 0.25   # comit_coef
LANE = 128     # TPU lane width
AUX_ROWS = 8   # extra output rows for z_t / z_p / prob / loss (requires B <= 8)


def _r8(n):
    return ((n + 7) // 8) * 8


def _ceil_to(n, m):
    return ((n + m - 1) // m) * m


# ----------------------- one-time host-side weight packing -----------------------
def build_weight_slab(params):
    """Pack every parameter into ONE lane-dense [R,128] f32 slab (done once, NumPy)."""
    emb = np.asarray(params["emb_table"], np.float32)                     # [V, E]
    wz_t, bz_t = (np.asarray(a, np.float32) for a in params["enc_t"])     # [E,DT],[1,DT]
    wz_p, bz_p = (np.asarray(a, np.float32) for a in params["enc_p"])     # [E,DP],[1,DP]
    cb_t = np.asarray(params["codebook_t"], np.float32)                   # [KT, DT]
    cb_p = np.asarray(params["codebook_p"], np.float32)                   # [KP, DP]
    wh, wt, wp, bh, wo, bo = (np.asarray(a, np.float32) for a in params["dec"])

    v, e = emb.shape
    dt, dp = wz_t.shape[1], wz_p.shape[1]
    kt, kp = cb_t.shape[0], cb_p.shape[0]
    h = wh.shape[1]
    vp = _ceil_to(v, LANE)

    blocks, layout = {}, {}
    row = 0

    def add(name, arr):
        nonlocal row
        layout[name] = row
        blocks[name] = arr
        row += _r8(arr.shape[0])

    add("emb", emb)                                          # [V, E]
    add("enc", np.concatenate([wz_t, wz_p], axis=1))         # [E, DT+DP]  (fused encoders)
    add("wh", wh)                                            # [E, H]
    add("wt", wt)                                            # [DT, H]
    add("wp", wp)                                            # [DP, H]
    add("cbt", cb_t)                                         # [KT, DT]
    add("cbp", cb_p)                                         # [KP, DP]
    add("b_enc", np.concatenate([bz_t, bz_p], axis=1))       # [1, DT+DP]
    add("bh", bh)                                            # [1, H]
    wo_pad = np.zeros((h, vp), np.float32)
    wo_pad[:, :v] = wo
    add("wo", wo_pad)                                        # [H, VP] (vocab padded to 128 lanes)
    bo_pad = np.zeros((1, vp), np.float32)
    bo_pad[0, :v] = bo[0]
    add("bo", bo_pad)                                        # [1, VP]

    slab = np.zeros((_r8(row), LANE), np.float32)
    for name, arr in blocks.items():
        r0 = layout[name]
        slab[r0:r0 + arr.shape[0], :arr.shape[1]] = arr

    dims = dict(V=v, E=e, DT=dt, DP=dp, KT=kt, KP=kp, H=h, VP=vp)
    return jnp.asarray(slab), layout, dims


# ----------------------- single fused forward kernel -----------------------
def fused_vqvae_kernel(ids_ref, mask_ref, w_ref, out_ref, *, L, D, batch, seq, comit):
    f32 = jnp.float32
    Bx, Sx = batch, seq
    BS = Bx * Sx
    Vx, Ex = D["V"], D["E"]
    DTx, DPx, KTx = D["DT"], D["DP"], D["KT"]
    Hd, VP = D["H"], D["VP"]

    ids = ids_ref[0:1, :]                                     # [1, BS] int32, lane-major
    mask = mask_ref[0:1, :]                                   # [1, BS] f32

    # ---- carve the weight slab (static ref slices: zero-cost views) ----
    emb   = w_ref[L["emb"]:L["emb"] + Vx, 0:Ex]               # [V, E]
    w_enc = w_ref[L["enc"]:L["enc"] + Ex, 0:DTx + DPx]        # [E, DT+DP]
    wh    = w_ref[L["wh"]:L["wh"] + Ex, 0:Hd]                 # [E, H]
    wt    = w_ref[L["wt"]:L["wt"] + DTx, 0:Hd]                # [DT, H]
    wp    = w_ref[L["wp"]:L["wp"] + DPx, 0:Hd]                # [DP, H]
    cb_t  = w_ref[L["cbt"]:L["cbt"] + KTx, 0:DTx]             # [KT, DT]
    cb_p  = w_ref[L["cbp"]:L["cbp"] + D["KP"], 0:DPx]         # [KP, DP]
    b_enc = w_ref[L["b_enc"]:L["b_enc"] + 1, 0:DTx + DPx]     # [1, DT+DP]
    bh    = w_ref[L["bh"]:L["bh"] + 1, 0:Hd]                  # [1, H]
    wo    = w_ref[L["wo"]:L["wo"] + Hd, :]                    # [H, VP]
    bo    = w_ref[L["bo"]:L["bo"] + 1, :]                     # [1, VP]

    # ---- embedding lookup: transposed one-hot MXU matmul (emb resident in VMEM) ----
    v_iota = jax.lax.broadcasted_iota(jnp.int32, (Vx, BS), 0)
    onehot_t = (v_iota == ids).astype(f32)                    # [V, BS]
    x = jax.lax.dot_general(onehot_t, emb, (((0,), (0,)), ((), ())),
                            preferred_element_type=f32)       # [BS, E]

    # ---- masked mean pooling (pool matrix built in-kernel from the pad mask) ----
    col = jax.lax.broadcasted_iota(jnp.int32, (Bx, BS), 1)
    lo = jax.lax.broadcasted_iota(jnp.int32, (Bx, BS), 0) * Sx
    sel = jnp.logical_and(col >= lo, col < lo + Sx)
    pool = jnp.where(sel, mask, 0.0)                          # [B, BS]
    denom = jnp.sum(pool, axis=-1, keepdims=True) + 1e-6
    pooled = jnp.dot(pool, x, preferred_element_type=f32) / denom   # [B, E]

    # ---- encoders fused into one matmul (variance heads unused -> dropped) ----
    zz = jnp.tanh(jnp.dot(pooled, w_enc, preferred_element_type=f32) + b_enc)
    z_t = zz[:, 0:DTx]
    z_p = zz[:, DTx:DTx + DPx]

    # ---- nearest-neighbour VQ ----
    def quantize(z, cb):
        z_sq = jnp.sum(z * z, axis=-1, keepdims=True)                          # [B, 1]
        c_sq = jnp.sum(cb * cb, axis=-1)[None, :]                              # [1, K]
        cross = jax.lax.dot_general(z, cb, (((1,), (1,)), ((), ())),
                                    preferred_element_type=f32)                # [B, K]
        dists = z_sq - 2.0 * cross + c_sq
        k = cb.shape[0]
        iota = jax.lax.broadcasted_iota(jnp.int32, dists.shape, 1)
        min_d = jnp.min(dists, axis=-1, keepdims=True)
        idx = jnp.min(jnp.where(dists == min_d, iota, k), axis=-1, keepdims=True)
        one = (iota == idx).astype(f32)
        return jnp.dot(one, cb, preferred_element_type=f32), dists

    zt_hat, dists_t = quantize(z_t, cb_t)   # distilling (fixed codebook); detached in torch
    zp_hat, _ = quantize(z_p, cb_p)         # dispersing

    # distilling-branch 'output' / prob = softmax over -distances
    neg = -dists_t
    neg = neg - jnp.max(neg, axis=-1, keepdims=True)
    ex = jnp.exp(neg)
    prob = ex / jnp.sum(ex, axis=-1, keepdims=True)                            # [B, KT]

    # dispersing-branch loss: forward value of codebook-loss + comit_coef * commitment-loss
    diff = zp_hat - z_p
    loss = jnp.reshape((1.0 + comit) * jnp.mean(diff * diff), (1, 1))

    # ---- decoder: flattened single matmul pass over all B*S rows ----
    cond = (jnp.dot(zt_hat, wt, preferred_element_type=f32)
            + jnp.dot(zp_hat, wp, preferred_element_type=f32) + bh)            # [B, H]
    r_iota = jax.lax.broadcasted_iota(jnp.int32, (BS, Bx), 0)
    b_lo = jax.lax.broadcasted_iota(jnp.int32, (BS, Bx), 1) * Sx
    expand = jnp.logical_and(r_iota >= b_lo, r_iota < b_lo + Sx).astype(f32)   # built in-kernel
    cond_rows = jnp.dot(expand, cond, preferred_element_type=f32)              # [BS, H]
    h = jnp.tanh(jnp.dot(x, wh, preferred_element_type=f32) + cond_rows)
    recon = jnp.dot(h, wo, preferred_element_type=f32) + bo                    # [BS, VP]

    # ---- single lane-dense output slab ----
    out_ref[0:BS, :] = recon                                   # unmasked 128-lane stores
    out_ref[BS:BS + AUX_ROWS, :] = jnp.zeros((AUX_ROWS, VP), f32)
    out_ref[BS:BS + Bx, 0:DTx] = z_t
    out_ref[BS:BS + Bx, DTx:DTx + DPx] = z_p
    out_ref[BS:BS + Bx, DTx + DPx:DTx + DPx + KTx] = prob
    out_ref[BS:BS + 1, DTx + DPx + KTx:DTx + DPx + KTx + 1] = loss


# ----------------------- Fix_VQ_VAE_Idx.forward (pretrain=False) -----------------------
def make_forward(params, batch, seq):
    wslab, L, D = build_weight_slab(params)          # hoisted: built exactly once
    assert batch <= AUX_ROWS
    BS = batch * seq
    VP = D["VP"]
    out_rows = BS + AUX_ROWS

    flops = 2 * (BS * D["V"] * D["E"]                          # one-hot embedding matmul
                 + batch * BS * D["E"]                         # pooling matmul
                 + batch * D["E"] * (D["DT"] + D["DP"])        # fused encoders
                 + 2 * batch * D["DT"] * D["KT"]
                 + 2 * batch * D["DP"] * D["KP"]               # VQ cross + quantize
                 + batch * (D["DT"] + D["DP"]) * D["H"]        # conditioning
                 + BS * batch * D["H"]                         # condition broadcast
                 + BS * D["E"] * D["H"]                        # x @ wh
                 + BS * D["H"] * VP)                           # output projection
    transcendentals = BS * D["H"] + batch * (D["DT"] + D["DP"]) + batch * D["KT"]
    bytes_accessed = 4 * (2 * BS + int(wslab.size) + out_rows * VP)

    kern = functools.partial(fused_vqvae_kernel, L=L, D=D,
                             batch=batch, seq=seq, comit=COMIT)
    call = pl.pallas_call(
        kern,
        out_shape=jax.ShapeDtypeStruct((out_rows, VP), jnp.float32),
        in_specs=[pl.BlockSpec(memory_space=pltpu.MemorySpace.VMEM) for _ in range(3)],
        out_specs=pl.BlockSpec(memory_space=pltpu.MemorySpace.VMEM),
        cost_estimate=pl.CostEstimate(flops=int(flops),
                                      transcendentals=int(transcendentals),
                                      bytes_accessed=int(bytes_accessed)),
    )

    @jax.jit
    def forward(inputs, x_pad_mask):
        # per-call data prep is just two free row-major reshapes of [B,S] arrays
        ids_row = inputs.reshape(1, BS).astype(jnp.int32)
        mask_row = x_pad_mask.reshape(1, BS).astype(jnp.float32)
        out = call(ids_row, mask_row, wslab)
        Vx, DTx, DPx, KTx = D["V"], D["DT"], D["DP"], D["KT"]
        recon = out[0:BS, 0:Vx].reshape(batch, seq, Vx)
        z_t = out[BS:BS + batch, 0:DTx]
        z_p = out[BS:BS + batch, DTx:DTx + DPx]
        prob = out[BS:BS + batch, DTx + DPx:DTx + DPx + KTx]
        loss_p = out[BS, DTx + DPx + KTx]
        return {"recon_result": recon, "z_t": z_t, "z_p": z_p,
                "loss_p": loss_p, "prob": prob}

    return forward


# ----------------------- pure-JAX reference for verification -----------------------
def ref_forward(params, inputs, mask):
    x = jnp.take(params["emb_table"], inputs, axis=0)

    def enc(wz, bz):
        denom = jnp.sum(mask, axis=1, keepdims=True) + 1e-6
        pooled = jnp.sum(x * mask[:, :, None], axis=1) / denom
        return jnp.tanh(pooled @ wz + bz)

    def vq(z, cb):
        d = (jnp.sum(z * z, -1, keepdims=True) - 2.0 * z @ cb.T
             + jnp.sum(cb * cb, -1)[None, :])
        idx = jnp.argmin(d, -1)
        q = cb[idx]
        prob = jax.nn.softmax(-d, -1)
        loss = (1.0 + COMIT) * jnp.mean((q - z) ** 2)
        return q, prob, loss

    z_t = enc(*params["enc_t"])
    z_p = enc(*params["enc_p"])
    zt_hat, prob_t, _ = vq(z_t, params["codebook_t"])
    zp_hat, _, loss_p = vq(z_p, params["codebook_p"])
    wh, wt, wp, bh, wo, bo = params["dec"]
    h = jnp.tanh(x @ wh + (zt_hat @ wt)[:, None, :] + (zp_hat @ wp)[:, None, :] + bh)
    recon = h @ wo + bo
    return recon, z_t, z_p, loss_p, prob_t


# ----------------------- main -----------------------
if __name__ == "__main__":
    key = jax.random.PRNGKey(0)
    ks = jax.random.split(key, 12)

    def init(k, shape, scale=0.1):
        return (scale * jax.random.normal(k, shape)).astype(jnp.float32)

    params = {
        "emb_table": init(ks[0], (V, E)),
        "enc_t": (init(ks[1], (E, DT)), init(ks[2], (1, DT))),
        "enc_p": (init(ks[3], (E, DP)), init(ks[4], (1, DP))),
        "codebook_t": init(ks[5], (KT, DT)),   # fixed / label_mat-derived distilling codebook
        "codebook_p": init(ks[6], (KP, DP)),   # dispersing codebook
        "dec": (init(ks[7], (E, H)), init(ks[8], (DT, H)), init(ks[9], (DP, H)),
                init(ks[10], (1, H)), init(ks[11], (H, V)),
                jnp.zeros((1, V), jnp.float32)),
    }

    inputs = jax.random.randint(jax.random.PRNGKey(42), (B, S), 0, V, dtype=jnp.int32)
    x_pad_mask = jnp.ones((B, S), jnp.float32).at[1, -2:].set(0.0)   # 1 = valid, 0 = pad

    forward = make_forward(params, B, S)
    out = jax.block_until_ready(forward(inputs, x_pad_mask))

    recon_r, zt_r, zp_r, lossp_r, prob_r = ref_forward(params, inputs, x_pad_mask)
    np.testing.assert_allclose(out["recon_result"], recon_r, rtol=2e-4, atol=2e-4)
    np.testing.assert_allclose(out["z_t"], zt_r, rtol=2e-4, atol=2e-4)
    np.testing.assert_allclose(out["z_p"], zp_r, rtol=2e-4, atol=2e-4)
    np.testing.assert_allclose(out["loss_p"], lossp_r, rtol=2e-4, atol=2e-4)
    np.testing.assert_allclose(out["prob"], prob_r, rtol=2e-4, atol=2e-4)

    print("KERNEL_OK")
</pallas_src>

<mosaic_0001>
module attributes {stable_mosaic.version = 11 : i64} {
  func.func @fused_vqvae_kernel(%arg0: memref<1x16xi32, #tpu.memory_space<vmem>>, %arg1: memref<1x16xf32, #tpu.memory_space<vmem>>, %arg2: memref<272x128xf32, #tpu.memory_space<vmem>>, %arg3: memref<24x128xf32, #tpu.memory_space<vmem>>) attributes {dimension_semantics = [], scalar_prefetch = 0 : i64, scratch_operands = 0 : i64, tpu.core_type = #tpu.core_type<tc>} {
    %c0 = arith.constant 0 : index
    %c0_0 = arith.constant 0 : index
    %0 = vector.load %arg0[%c0, %c0_0] : memref<1x16xi32, #tpu.memory_space<vmem>>, vector<1x16xi32>
    %c0_1 = arith.constant 0 : index
    %c0_2 = arith.constant 0 : index
    %1 = vector.load %arg1[%c0_1, %c0_2] : memref<1x16xf32, #tpu.memory_space<vmem>>, vector<1x16xf32>
    %c0_3 = arith.constant 0 : index
    %c0_4 = arith.constant 0 : index
    %2 = vector.load %arg2[%c0_3, %c0_4] : memref<272x128xf32, #tpu.memory_space<vmem>>, vector<64x32xf32>
    %c64 = arith.constant 64 : index
    %c0_5 = arith.constant 0 : index
    %3 = vector.load %arg2[%c64, %c0_5] : memref<272x128xf32, #tpu.memory_space<vmem>>, vector<32x64xf32>
    %c96 = arith.constant 96 : index
    %c0_6 = arith.constant 0 : index
    %4 = vector.load %arg2[%c96, %c0_6] : memref<272x128xf32, #tpu.memory_space<vmem>>, vector<32x32xf32>
    %c128 = arith.constant 128 : index
    %c0_7 = arith.constant 0 : index
    %5 = vector.load %arg2[%c128, %c0_7] : memref<272x128xf32, #tpu.memory_space<vmem>>, vector<32x32xf32>
    %c160 = arith.constant 160 : index
    %c0_8 = arith.constant 0 : index
    %6 = vector.load %arg2[%c160, %c0_8] : memref<272x128xf32, #tpu.memory_space<vmem>>, vector<32x32xf32>
    %c192 = arith.constant 192 : index
    %c0_9 = arith.constant 0 : index
    %7 = vector.load %arg2[%c192, %c0_9] : memref<272x128xf32, #tpu.memory_space<vmem>>, vector<16x32xf32>
    %c208 = arith.constant 208 : index
    %c0_10 = arith.constant 0 : index
    %8 = vector.load %arg2[%c208, %c0_10] : memref<272x128xf32, #tpu.memory_space<vmem>>, vector<8x32xf32>
    %c216 = arith.constant 216 : index
    %c0_11 = arith.constant 0 : index
    %9 = vector.load %arg2[%c216, %c0_11] : memref<272x128xf32, #tpu.memory_space<vmem>>, vector<1x64xf32>
    %c224 = arith.constant 224 : index
    %c0_12 = arith.constant 0 : index
    %10 = vector.load %arg2[%c224, %c0_12] : memref<272x128xf32, #tpu.memory_space<vmem>>, vector<1x32xf32>
    %c232 = arith.constant 232 : index
    %c0_13 = arith.constant 0 : index
    %11 = vector.load %arg2[%c232, %c0_13] : memref<272x128xf32, #tpu.memory_space<vmem>>, vector<32x128xf32>
    %c264 = arith.constant 264 : index
    %c0_14 = arith.constant 0 : index
    %12 = vector.load %arg2[%c264, %c0_14] : memref<272x128xf32, #tpu.memory_space<vmem>>, vector<1x128xf32>
    %13 = tpu.iota {dimensions = array<i32: 0>} : vector<64x16xi32>
    %14 = vector.broadcast %0 : vector<1x16xi32> to vector<64x16xi32>
    %15 = arith.cmpi eq, %13, %14 : vector<64x16xi32>
    %16 = arith.extui %15 : vector<64x16xi1> to vector<64x16xi32>
    %17 = arith.sitofp %16 : vector<64x16xi32> to vector<64x16xf32>
    %cst = arith.constant dense<0.000000e+00> : vector<16x32xf32>
    %18 = tpu.matmul %17, %2, %cst {dimension_numbers = #tpu.dot_dimension_numbers<[0], [0], [1], [1], [0, 1, 1, 1], [], []>} : vector<64x16xf32>, vector<64x32xf32>, vector<16x32xf32> -> vector<16x32xf32>
    %19 = tpu.iota {dimensions = array<i32: 1>} : vector<2x16xi32>
    %20 = tpu.iota {dimensions = array<i32: 0>} : vector<2x16xi32>
    %c8_i32 = arith.constant 8 : i32
    %21 = vector.broadcast %c8_i32 : i32 to vector<2x16xi32>
    %22 = arith.muli %20, %21 : vector<2x16xi32>
    %23 = arith.cmpi sge, %19, %22 : vector<2x16xi32>
    %c8_i32_15 = arith.constant 8 : i32
    %24 = vector.broadcast %c8_i32_15 : i32 to vector<2x16xi32>
    %25 = arith.addi %22, %24 : vector<2x16xi32>
    %26 = arith.cmpi slt, %19, %25 : vector<2x16xi32>
    %27 = arith.andi %23, %26 : vector<2x16xi1>
    %cst_16 = arith.constant 0.000000e+00 : f32
    %28 = vector.shape_cast %1 : vector<1x16xf32> to vector<1x16xf32>
    %29 = vector.broadcast %28 : vector<1x16xf32> to vector<2x16xf32>
    %30 = vector.broadcast %cst_16 : f32 to vector<2x16xf32>
    %31 = arith.select %27, %29, %30 : vector<2x16xi1>, vector<2x16xf32>
    %cst_17 = arith.constant dense<0.000000e+00> : vector<2xf32>
    %32 = vector.multi_reduction <add>, %31, %cst_17 [1] : vector<2x16xf32> to vector<2xf32>
    %33 = vector.shape_cast %32 : vector<2xf32> to vector<2x1xf32>
    %cst_18 = arith.constant 9.99999997E-7 : f32
    %34 = vector.broadcast %cst_18 : f32 to vector<2x1xf32>
    %35 = arith.addf %33, %34 : vector<2x1xf32>
    %cst_19 = arith.constant dense<0.000000e+00> : vector<2x32xf32>
    %36 = tpu.matmul %31, %18, %cst_19 {dimension_numbers = #tpu.dot_dimension_numbers<[1], [0], [0], [1], [0, 0, 1, 1], [], []>} : vector<2x16xf32>, vector<16x32xf32>, vector<2x32xf32> -> vector<2x32xf32>
    %37 = vector.broadcast %35 : vector<2x1xf32> to vector<2x32xf32>
    %38 = arith.divf %36, %37 : vector<2x32xf32>
    %cst_20 = arith.constant dense<0.000000e+00> : vector<2x64xf32>
    %39 = tpu.matmul %38, %3, %cst_20 {dimension_numbers = #tpu.dot_dimension_numbers<[1], [0], [0], [1], [0, 0, 1, 1], [], []>} : vector<2x32xf32>, vector<32x64xf32>, vector<2x64xf32> -> vector<2x64xf32>
    %40 = vector.broadcast %9 : vector<1x64xf32> to vector<2x64xf32>
    %41 = arith.addf %39, %40 : vector<2x64xf32>
    %42 = math.tanh %41 : vector<2x64xf32>
    %43 = vector.extract_strided_slice %42 {offsets = [0, 0], sizes = [2, 32], strides = [1, 1]} : vector<2x64xf32> to vector<2x32xf32>
    %44 = vector.extract_strided_slice %42 {offsets = [0, 32], sizes = [2, 32], strides = [1, 1]} : vector<2x64xf32> to vector<2x32xf32>
    %45 = arith.mulf %43, %43 : vector<2x32xf32>
    %cst_21 = arith.constant dense<0.000000e+00> : vector<2xf32>
    %46 = vector.multi_reduction <add>, %45, %cst_21 [1] : vector<2x32xf32> to vector<2xf32>
    %47 = vector.shape_cast %46 : vector<2xf32> to vector<2x1xf32>
    %48 = arith.mulf %7, %7 : vector<16x32xf32>
    %cst_22 = arith.constant dense<0.000000e+00> : vector<16xf32>
    %49 = vector.multi_reduction <add>, %48, %cst_22 [1] : vector<16x32xf32> to vector<16xf32>
    %50 = vector.shape_cast %49 : vector<16xf32> to vector<1x16xf32>
    %cst_23 = arith.constant dense<0.000000e+00> : vector<2x16xf32>
    %51 = tpu.matmul %43, %7, %cst_23 {dimension_numbers = #tpu.dot_dimension_numbers<[1], [1], [0], [0], [0, 0, 1, 0], [], []>} : vector<2x32xf32>, vector<16x32xf32>, vector<2x16xf32> -> vector<2x16xf32>
    %cst_24 = arith.constant 2.000000e+00 : f32
    %52 = vector.broadcast %cst_24 : f32 to vector<2x16xf32>
    %53 = arith.mulf %52, %51 : vector<2x16xf32>
    %54 = vector.broadcast %47 : vector<2x1xf32> to vector<2x16xf32>
    %55 = arith.subf %54, %53 : vector<2x16xf32>
    %56 = vector.broadcast %50 : vector<1x16xf32> to vector<2x16xf32>
    %57 = arith.addf %55, %56 : vector<2x16xf32>
    %58 = tpu.iota {dimensions = array<i32: 1>} : vector<2x16xi32>
    %cst_25 = arith.constant dense<0x7F800000> : vector<2xf32>
    %59 = vector.multi_reduction <minimumf>, %57, %cst_25 [1] : vector<2x16xf32> to vector<2xf32>
    %60 = vector.shape_cast %59 : vector<2xf32> to vector<2x1xf32>
    %61 = vector.broadcast %60 : vector<2x1xf32> to vector<2x16xf32>
    %62 = arith.cmpf oeq, %57, %61 : vector<2x16xf32>
    %c16_i32 = arith.constant 16 : i32
    %63 = vector.broadcast %c16_i32 : i32 to vector<2x16xi32>
    %64 = arith.select %62, %58, %63 : vector<2x16xi1>, vector<2x16xi32>
    %cst_26 = arith.constant dense<2147483647> : vector<2xi32>
    %65 = vector.multi_reduction <minsi>, %64, %cst_26 [1] : vector<2x16xi32> to vector<2xi32>
    %66 = vector.shape_cast %65 : vector<2xi32> to vector<2x1xi32>
    %67 = vector.broadcast %66 : vector<2x1xi32> to vector<2x16xi32>
    %68 = arith.cmpi eq, %58, %67 : vector<2x16xi32>
    %69 = arith.extui %68 : vector<2x16xi1> to vector<2x16xi32>
    %70 = arith.sitofp %69 : vector<2x16xi32> to vector<2x16xf32>
    %cst_27 = arith.constant dense<0.000000e+00> : vector<2x32xf32>
    %71 = tpu.matmul %70, %7, %cst_27 {dimension_numbers = #tpu.dot_dimension_numbers<[1], [0], [0], [1], [0, 0, 1, 1], [], []>} : vector<2x16xf32>, vector<16x32xf32>, vector<2x32xf32> -> vector<2x32xf32>
    %72 = arith.mulf %44, %44 : vector<2x32xf32>
    %cst_28 = arith.constant dense<0.000000e+00> : vector<2xf32>
    %73 = vector.multi_reduction <add>, %72, %cst_28 [1] : vector<2x32xf32> to vector<2xf32>
    %74 = vector.shape_cast %73 : vector<2xf32> to vector<2x1xf32>
    %75 = arith.mulf %8, %8 : vector<8x32xf32>
    %cst_29 = arith.constant dense<0.000000e+00> : vector<8xf32>
    %76 = vector.multi_reduction <add>, %75, %cst_29 [1] : vector<8x32xf32> to vector<8xf32>
    %77 = vector.shape_cast %76 : vector<8xf32> to vector<1x8xf32>
    %cst_30 = arith.constant dense<0.000000e+00> : vector<2x8xf32>
    %78 = tpu.matmul %44, %8, %cst_30 {dimension_numbers = #tpu.dot_dimension_numbers<[1], [1], [0], [0], [0, 0, 1, 0], [], []>} : vector<2x32xf32>, vector<8x32xf32>, vector<2x8xf32> -> vector<2x8xf32>
    %cst_31 = arith.constant 2.000000e+00 : f32
    %79 = vector.broadcast %cst_31 : f32 to vector<2x8xf32>
    %80 = arith.mulf %79, %78 : vector<2x8xf32>
    %81 = vector.broadcast %74 : vector<2x1xf32> to vector<2x8xf32>
    %82 = arith.subf %81, %80 : vector<2x8xf32>
    %83 = vector.broadcast %77 : vector<1x8xf32> to vector<2x8xf32>
    %84 = arith.addf %82, %83 : vector<2x8xf32>
    %85 = tpu.iota {dimensions = array<i32: 1>} : vector<2x8xi32>
    %cst_32 = arith.constant dense<0x7F800000> : vector<2xf32>
    %86 = vector.multi_reduction <minimumf>, %84, %cst_32 [1] : vector<2x8xf32> to vector<2xf32>
    %87 = vector.shape_cast %86 : vector<2xf32> to vector<2x1xf32>
    %88 = vector.broadcast %87 : vector<2x1xf32> to vector<2x8xf32>
    %89 = arith.cmpf oeq, %84, %88 : vector<2x8xf32>
    %c8_i32_33 = arith.constant 8 : i32
    %90 = vector.broadcast %c8_i32_33 : i32 to vector<2x8xi32>
    %91 = arith.select %89, %85, %90 : vector<2x8xi1>, vector<2x8xi32>
    %cst_34 = arith.constant dense<2147483647> : vector<2xi32>
    %92 = vector.multi_reduction <minsi>, %91, %cst_34 [1] : vector<2x8xi32> to vector<2xi32>
    %93 = vector.shape_cast %92 : vector<2xi32> to vector<2x1xi32>
    %94 = vector.broadcast %93 : vector<2x1xi32> to vector<2x8xi32>
    %95 = arith.cmpi eq, %85, %94 : vector<2x8xi32>
    %96 = arith.extui %95 : vector<2x8xi1> to vector<2x8xi32>
    %97 = arith.sitofp %96 : vector<2x8xi32> to vector<2x8xf32>
    %cst_35 = arith.constant dense<0.000000e+00> : vector<2x32xf32>
    %98 = tpu.matmul %97, %8, %cst_35 {dimension_numbers = #tpu.dot_dimension_numbers<[1], [0], [0], [1], [0, 0, 1, 1], [], []>} : vector<2x8xf32>, vector<8x32xf32>, vector<2x32xf32> -> vector<2x32xf32>
    %cst_36 = arith.constant 0.000000e+00 : f32
    %99 = vector.broadcast %cst_36 : f32 to vector<2x16xf32>
    %100 = arith.subf %99, %57 : vector<2x16xf32>
    %cst_37 = arith.constant dense<0xFF800000> : vector<2xf32>
    %101 = vector.multi_reduction <maximumf>, %100, %cst_37 [1] : vector<2x16xf32> to vector<2xf32>
    %102 = vector.shape_cast %101 : vector<2xf32> to vector<2x1xf32>
    %103 = vector.broadcast %102 : vector<2x1xf32> to vector<2x16xf32>
    %104 = arith.subf %100, %103 : vector<2x16xf32>
    %105 = math.exp %104 : vector<2x16xf32>
    %cst_38 = arith.constant dense<0.000000e+00> : vector<2xf32>
    %106 = vector.multi_reduction <add>, %105, %cst_38 [1] : vector<2x16xf32> to vector<2xf32>
    %107 = vector.shape_cast %106 : vector<2xf32> to vector<2x1xf32>
    %108 = vector.broadcast %107 : vector<2x1xf32> to vector<2x16xf32>
    %109 = arith.divf %105, %108 : vector<2x16xf32>
    %110 = arith.subf %98, %44 : vector<2x32xf32>
    %111 = arith.mulf %110, %110 : vector<2x32xf32>
    %112 = vector.shape_cast %111 : vector<2x32xf32> to vector<1x2x32xf32>
    %cst_39 = arith.constant dense<0.000000e+00> : vector<1xf32>
    %113 = vector.multi_reduction <add>, %112, %cst_39 [1, 2] : vector<1x2x32xf32> to vector<1xf32>
    %114 = vector.shape_cast %113 : vector<1xf32> to vector<1x1x1xf32>
    %115 = vector.extract %114[0, 0, 0] : f32 from vector<1x1x1xf32>
    %cst_40 = arith.constant 6.400000e+01 : f32
    %116 = arith.divf %115, %cst_40 : f32
    %cst_41 = arith.constant 1.250000e+00 : f32
    %117 = arith.mulf %cst_41, %116 : f32
    %118 = vector.broadcast %117 : f32 to vector<1x1xf32>
    %cst_42 = arith.constant dense<0.000000e+00> : vector<2x32xf32>
    %119 = tpu.matmul %71, %5, %cst_42 {dimension_numbers = #tpu.dot_dimension_numbers<[1], [0], [0], [1], [0, 0, 1, 1], [], []>} : vector<2x32xf32>, vector<32x32xf32>, vector<2x32xf32> -> vector<2x32xf32>
    %cst_43 = arith.constant dense<0.000000e+00> : vector<2x32xf32>
    %120 = tpu.matmul %98, %6, %cst_43 {dimension_numbers = #tpu.dot_dimension_numbers<[1], [0], [0], [1], [0, 0, 1, 1], [], []>} : vector<2x32xf32>, vector<32x32xf32>, vector<2x32xf32> -> vector<2x32xf32>
    %121 = arith.addf %119, %120 : vector<2x32xf32>
    %122 = vector.broadcast %10 : vector<1x32xf32> to vector<2x32xf32>
    %123 = arith.addf %121, %122 : vector<2x32xf32>
    %124 = tpu.iota {dimensions = array<i32: 0>} : vector<16x2xi32>
    %125 = tpu.iota {dimensions = array<i32: 1>} : vector<16x2xi32>
    %c8_i32_44 = arith.constant 8 : i32
    %126 = vector.broadcast %c8_i32_44 : i32 to vector<16x2xi32>
    %127 = arith.muli %125, %126 : vector<16x2xi32>
    %128 = arith.cmpi sge, %124, %127 : vector<16x2xi32>
    %c8_i32_45 = arith.constant 8 : i32
    %129 = vector.broadcast %c8_i32_45 : i32 to vector<16x2xi32>
    %130 = arith.addi %127, %129 : vector<16x2xi32>
    %131 = arith.cmpi slt, %124, %130 : vector<16x2xi32>
    %132 = arith.andi %128, %131 : vector<16x2xi1>
    %133 = arith.extui %132 : vector<16x2xi1> to vector<16x2xi32>
    %134 = arith.sitofp %133 : vector<16x2xi32> to vector<16x2xf32>
    %cst_46 = arith.constant dense<0.000000e+00> : vector<16x32xf32>
    %135 = tpu.matmul %134, %123, %cst_46 {dimension_numbers = #tpu.dot_dimension_numbers<[1], [0], [0], [1], [0, 0, 1, 1], [], []>} : vector<16x2xf32>, vector<2x32xf32>, vector<16x32xf32> -> vector<16x32xf32>
    %cst_47 = arith.constant dense<0.000000e+00> : vector<16x32xf32>
    %136 = tpu.matmul %18, %4, %cst_47 {dimension_numbers = #tpu.dot_dimension_numbers<[1], [0], [0], [1], [0, 0, 1, 1], [], []>} : vector<16x32xf32>, vector<32x32xf32>, vector<16x32xf32> -> vector<16x32xf32>
    %137 = arith.addf %136, %135 : vector<16x32xf32>
    %138 = math.tanh %137 : vector<16x32xf32>
    %cst_48 = arith.constant dense<0.000000e+00> : vector<16x128xf32>
    %139 = tpu.matmul %138, %11, %cst_48 {dimension_numbers = #tpu.dot_dimension_numbers<[1], [0], [0], [1], [0, 0, 1, 1], [], []>} : vector<16x32xf32>, vector<32x128xf32>, vector<16x128xf32> -> vector<16x128xf32>
    %140 = vector.broadcast %12 : vector<1x128xf32> to vector<16x128xf32>
    %141 = arith.addf %139, %140 : vector<16x128xf32>
    %c0_49 = arith.constant 0 : index
    %c0_50 = arith.constant 0 : index
    %142 = vector.load %arg3[%c0_49, %c0_50] : memref<24x128xf32, #tpu.memory_space<vmem>>, vector<16x128xf32>
    tpu.vector_store %arg3[%c0_49, %c0_50], %141 {strides = array<i32>} : memref<24x128xf32, #tpu.memory_space<vmem>>, vector<16x128xf32>,
    %cst_51 = arith.constant 0.000000e+00 : f32
    %143 = vector.broadcast %cst_51 : f32 to vector<8x128xf32>
    %c16 = arith.constant 16 : index
    %c0_52 = arith.constant 0 : index
    %144 = vector.load %arg3[%c16, %c0_52] : memref<24x128xf32, #tpu.memory_space<vmem>>, vector<8x128xf32>
    tpu.vector_store %arg3[%c16, %c0_52], %143 {strides = array<i32>} : memref<24x128xf32, #tpu.memory_space<vmem>>, vector<8x128xf32>,
    %c16_53 = arith.constant 16 : index
    %c0_54 = arith.constant 0 : index
    %145 = vector.load %arg3[%c16_53, %c0_54] : memref<24x128xf32, #tpu.memory_space<vmem>>, vector<2x32xf32>
    tpu.vector_store %arg3[%c16_53, %c0_54], %43 {strides = array<i32>} : memref<24x128xf32, #tpu.memory_space<vmem>>, vector<2x32xf32>,
    %c16_55 = arith.constant 16 : index
    %c32 = arith.constant 32 : index
    %146 = vector.load %arg3[%c16_55, %c32] : memref<24x128xf32, #tpu.memory_space<vmem>>, vector<2x32xf32>
    tpu.vector_store %arg3[%c16_55, %c32], %44 {strides = array<i32>} : memref<24x128xf32, #tpu.memory_space<vmem>>, vector<2x32xf32>,
    %c16_56 = arith.constant 16 : index
    %c64_57 = arith.constant 64 : index
    %147 = vector.load %arg3[%c16_56, %c64_57] : memref<24x128xf32, #tpu.memory_space<vmem>>, vector<2x16xf32>
    tpu.vector_store %arg3[%c16_56, %c64_57], %109 {strides = array<i32>} : memref<24x128xf32, #tpu.memory_space<vmem>>, vector<2x16xf32>,
    %c16_58 = arith.constant 16 : index
    %c80 = arith.constant 80 : index
    %148 = vector.load %arg3[%c16_58, %c80] : memref<24x128xf32, #tpu.memory_space<vmem>>, vector<1x1xf32>
    tpu.vector_store %arg3[%c16_58, %c80], %118 {strides = array<i32>} : memref<24x128xf32, #tpu.memory_space<vmem>>, vector<1x1xf32>,
    return
  }
}

</mosaic_0001>

<llo_original>
// kernel: forward.1
$region0: #{forward.1}
  #allocation0 [shape = 'u32[]', space=smem, size = 0x4, offset = 0x4, fixed_abs, tag = 'smem constant byte address 0x4 - core index']
  #allocation1 [shape = 'u32[144,128]{1,0:T(1,128)}', space=vmem, size = 0x12000, scoped, tag = 'internal scratch']
  %s0 = inlined_call_operand.vmem [shape: s32[1,16], index: 0, kind: input, shape index: {}]
  %s1 = inlined_call_operand.vmem [shape: f32[1,16], index: 1, kind: input, shape index: {}]
  %s2 = inlined_call_operand.hbm [shape: f32[272,128], index: 2, kind: input, shape index: {}]
  %s3 = inlined_call_operand.vmem [shape: f32[24,128], index: 3, kind: output, shape index: {}]
  %s4 = sld [smem:[#allocation0]]
  $region26: #{forward.1} parent=0
    _
  %s6 = ssub.s32 1, %s4
  %s7 = scalar_select 0, %s6, %s4
  $region1: #{forward.1} parent=0
    #allocation2 [shape = 'u8[139264]{0}', space=vmem, size = 0x22000, scoped, tag = 'input window, operand 2, single buffered']
    #allocation3 [shape = 's32[1]{0}', space=sflag, size = 0x4, scoped, tag = 'scoped memory for forward.1']
    %8 = vsyncpa [#allocation3], 0
    // Predicated region
    $region2: #{forward.1} parent=1 // pred_check
      _
    $region3: #{forward.1} parent=1 // pred_check_branch
      %10 = sbr.rel (0) target = $region5
    $region4: #{forward.1} parent=1 // pred_region
      _
    $region5: #{forward.1} parent=1 // pred_fallthru
      _
    // Predicated region
    $region6: #{forward.1} parent=1 // pred_check
      _
    $region7: #{forward.1} parent=1 // pred_check_branch
      %12 = sbr.rel (0) target = $region9
    $region8: #{forward.1} parent=1 // pred_region
      _
    $region9: #{forward.1} parent=1 // pred_fallthru
      _
    // Predicated region
    $region10: #{forward.1} parent=1 // pred_check
      _
    $region11: #{forward.1} parent=1 // pred_check_branch
      %14 = sbr.rel (0) target = $region13
    $region12: #{forward.1} parent=1 // pred_region
      %s16 = ssub.s32 4352, 4352
      %17 = vsyncadd [#allocation3], %s16
      %s18 = sshll.u32 [#allocation2], 4
      %s19 = int_to_ptr.vmem [resolvable:$true] %s18
      %24 = dma.hbm_to_vmem [thread:$0]  %s2, 4352, %s19, [#allocation3], 128, 128, 8
    $region13: #{forward.1} parent=1 // pred_fallthru
      _
    // Predicated region
    $region14: #{forward.1} parent=1 // pred_check
      _
    $region15: #{forward.1} parent=1 // pred_check_branch
      %26 = sbr.rel (0) target = $region17
    $region16: #{forward.1} parent=1 // pred_region
      %27 = dma.done [#allocation3], 4352
    $region17: #{forward.1} parent=1 // pred_fallthru
      _
    %v28 = vld [vmem:[%s0] sm:$0x1]
    %v29 = vld [vmem:[%s1] sm:$0x1]
    %v30 = vld [vmem:[#allocation2] sm:$0xff]
    %v31 = vld [vmem:[#allocation2 + $0x8] sm:$0xff]
    %v32 = vld [vmem:[#allocation2 + $0x10] sm:$0xff]
    %v33 = vld [vmem:[#allocation2 + $0x18] sm:$0xff]
    %v34 = vld [vmem:[#allocation2 + $0x20] sm:$0xff]
    %v35 = vld [vmem:[#allocation2 + $0x28] sm:$0xff]
    %v36 = vld [vmem:[#allocation2 + $0x30] sm:$0xff]
    %v37 = vld [vmem:[#allocation2 + $0x38] sm:$0xff]
    %v38 = vld [vmem:[#allocation2 + $0x40] sm:$0xff]
    %v39 = vld [vmem:[#allocation2 + $0x48] sm:$0xff]
    %v40 = vld [vmem:[#allocation2 + $0x50] sm:$0xff]
    %v41 = vld [vmem:[#allocation2 + $0x58] sm:$0xff]
    %v42 = vld [vmem:[#allocation2 + $0x60] sm:$0xff]
    %v43 = vld [vmem:[#allocation2 + $0x68] sm:$0xff]
    %v44 = vld [vmem:[#allocation2 + $0x70] sm:$0xff]
    %v45 = vld [vmem:[#allocation2 + $0x78] sm:$0xff]
    %v46 = vld [vmem:[#allocation2 + $0x80] sm:$0xff]
    %v47 = vld [vmem:[#allocation2 + $0x88] sm:$0xff]
    %v48 = vld [vmem:[#allocation2 + $0x90] sm:$0xff]
    %v49 = vld [vmem:[#allocation2 + $0x98] sm:$0xff]
    %v50 = vld [vmem:[#allocation2 + $0xa0] sm:$0xff]
    %v51 = vld [vmem:[#allocation2 + $0xa8] sm:$0xff]
    %v52 = vld [vmem:[#allocation2 + $0xb0] sm:$0xff]
    %v53 = vld [vmem:[#allocation2 + $0xb8] sm:$0xff]
    %v54 = vld [vmem:[#allocation2 + $0xc0] sm:$0xff]
    %v55 = vld [vmem:[#allocation2 + $0xc8] sm:$0xff]
    %v56 = vld [vmem:[#allocation2 + $0xd0] sm:$0xff]
    %v57 = vld [vmem:[#allocation2 + $0xd8] sm:$0x1]
    %v58 = vld [vmem:[#allocation2 + $0xe0] sm:$0x1]
    %v59 = vld [vmem:[#allocation2 + $0xe8] sm:$0xff]
    %v60 = vld [vmem:[#allocation2 + $0xf0] sm:$0xff]
    %v61 = vld [vmem:[#allocation2 + $0xf8] sm:$0xff]
    %v62 = vld [vmem:[#allocation2 + $0x100] sm:$0xff]
    %v63 = vld [vmem:[#allocation2 + $0x108] sm:$0x1]
    %v64 = vlaneseq
    %v65 = vshrl.u32 %v64, 7
    %v66 = vadd.s32 %v65, 8
    %v67 = vadd.s32 %v65, 16
    %v68 = vadd.s32 %v65, 24
    %v69 = vadd.s32 %v65, 32
    %v70 = vadd.s32 %v65, 40
    %v71 = vadd.s32 %v65, 48
    %v72 = vadd.s32 %v65, 56
    %v73 = vlaneseq
    %v74 = vshrl.u32 %v73, 7
    %v75 = vsub.s32 0, %v74
    %v76 = vrot.slane %v28, %v75
    %vm77 = vcmp.eq.s32.totalorder %v65, %v76
    %vm78 = vcmp.eq.s32.totalorder %v66, %v76
    %vm79 = vcmp.eq.s32.totalorder %v67, %v76
    %vm80 = vcmp.eq.s32.totalorder %v68, %v76
    %vm81 = vcmp.eq.s32.totalorder %v69, %v76
    %vm82 = vcmp.eq.s32.totalorder %v70, %v76
    %vm83 = vcmp.eq.s32.totalorder %v71, %v76
    %vm84 = vcmp.eq.s32.totalorder %v72, %v76
    %v85 = vsel %vm77, 1, 0
    %v86 = vsel %vm78, 1, 0
    %v87 = vsel %vm79, 1, 0
    %v88 = vsel %vm80, 1, 0
    %v89 = vsel %vm81, 1, 0
    %v90 = vsel %vm82, 1, 0
    %v91 = vsel %vm83, 1, 0
    %v92 = vsel %vm84, 1, 0
    %v93 = vcvt.s32.f32 %v85
    %v94 = vcvt.s32.f32 %v86
    %v95 = vcvt.s32.f32 %v87
    %v96 = vcvt.s32.f32 %v88
    %v97 = vcvt.s32.f32 %v89
    %v98 = vcvt.s32.f32 %v90
    %v99 = vcvt.s32.f32 %v91
    %v100 = vcvt.s32.f32 %v92
    %101 = vxpose.xlu0.b32.start [1/16] %v93, 128
    %102 = vxpose.xlu0.b32.cont [2/16] %v94, 128
    %103 = vxpose.xlu0.b32.cont [3/16] %v95, 128
    %104 = vxpose.xlu0.b32.cont [4/16] %v96, 128
    %105 = vxpose.xlu0.b32.cont [5/16] %v97, 128
    %106 = vxpose.xlu0.b32.cont [6/16] %v98, 128
    %107 = vxpose.xlu0.b32.cont [7/16] %v99, 128
    %108 = vxpose.xlu0.b32.cont [8/16] %v100, 128
    %109 = vxpose.xlu0.b32.cont [9/16] 0.0, 128
    %110 = vxpose.xlu0.b32.cont [10/16] 0.0, 128
    %111 = vxpose.xlu0.b32.cont [11/16] 0.0, 128
    %112 = vxpose.xlu0.b32.cont [12/16] 0.0, 128
    %113 = vxpose.xlu0.b32.cont [13/16] 0.0, 128
    %114 = vxpose.xlu0.b32.cont [14/16] 0.0, 128
    %115 = vxpose.xlu0.b32.cont [15/16] 0.0, 128
    %116 = vxpose.xlu0.b32.end [16/16] 0.0, 128
    %v117 = vpop.trf.xlu0
    %v118 = vpop.trf.xlu0
    %v119 = vpop.trf.xlu0
    %v120 = vpop.trf.xlu0
    %v121 = vpop.trf.xlu0
    %v122 = vpop.trf.xlu0
    %v123 = vpop.trf.xlu0
    %v124 = vpop.trf.xlu0
    %v125 = vpop.trf.xlu0
    %v126 = vpop.trf.xlu0
    %v127 = vpop.trf.xlu0
    %v128 = vpop.trf.xlu0
    %v129 = vpop.trf.xlu0
    %v130 = vpop.trf.xlu0
    %v131 = vpop.trf.xlu0
    %v132 = vpop.trf.xlu0
    %vm133 = vcmask 523264
    %v135 = vsel %vm133, %v117, 0
    %v138 = vsel %vm133, %v118, 0
    %140 = vmatprep.subr.mxu0 0.0
    %141 = vmatpush1.msra.mxu0 %v30
    %142 = vmatprep.subr.mxu0 0.0
    %143 = vmatpush1.msra.mxu0 %v31
    %144 = vmatprep.subr.mxu0 0.0
    %145 = vmatpush1.msra.mxu0 %v32
    %146 = vmatprep.subr.mxu0 0.0
    %147 = vmatpush1.msra.mxu0 %v33
    %148 = vmatprep.subr.mxu0 0.0
    %149 = vmatpush1.msra.mxu0 %v34
    %150 = vmatprep.subr.mxu0 0.0
    %151 = vmatpush1.msra.mxu0 %v35
    %152 = vmatprep.subr.mxu0 0.0
    %153 = vmatpush1.msra.mxu0 %v36
    %154 = vmatprep.subr.mxu0 0.0
    %155 = vmatpush1.msra.mxu0 %v37
    %156 = vmatprep.subr.mxu0 0.0
    %157 = vmatpush1.msra.mxu0 0.0
    %158 = vmatprep.subr.mxu0 0.0
    %159 = vmatpush1.msra.mxu0 0.0
    %160 = vmatprep.subr.mxu0 0.0
    %161 = vmatpush1.msra.mxu0 0.0
    %162 = vmatprep.subr.mxu0 0.0
    %163 = vmatpush1.msra.mxu0 0.0
    %164 = vmatprep.subr.mxu0 0.0
    %165 = vmatpush1.msra.mxu0 0.0
    %166 = vmatprep.subr.mxu0 0.0
    %167 = vmatpush1.msra.mxu0 0.0
    %168 = vmatprep.subr.mxu0 0.0
    %169 = vmatpush1.msra.mxu0 0.0
    %170 = vmatprep.subr.mxu0 0.0
    %171 = vmatpush1.msra.mxu0 0.0
    %172 = vmatprep.subr.mxu0 0.0
    %173 = vmatpush1.msra.mxu0 0.0
    %174 = vmatprep.subr.mxu0 0.0
    %175 = vmatpush1.msra.mxu0 0.0
    %176 = vmatprep.subr.mxu0 0.0
    %177 = vmatpush1.msra.mxu0 0.0
    %178 = vmatprep.subr.mxu0 0.0
    %179 = vmatpush1.msra.mxu0 0.0
    %180 = vmatprep.subr.mxu0 0.0
    %181 = vmatpush1.msra.mxu0 0.0
    %182 = vmatprep.subr.mxu0 0.0
    %183 = vmatpush1.msra.mxu0 0.0
    %184 = vmatprep.subr.mxu0 0.0
    %185 = vmatpush1.msra.mxu0 0.0
    %186 = vmatprep.subr.mxu0 0.0
    %187 = vmatpush1.msra.mxu0 0.0
    %188 = vmatprep.subr.mxu0 0.0
    %189 = vmatpush1.msra.mxu0 0.0
    %190 = vmatprep.subr.mxu0 0.0
    %191 = vmatpush1.msra.mxu0 0.0
    %192 = vmatprep.subr.mxu0 0.0
    %193 = vmatpush1.msra.mxu0 0.0
    %194 = vmatprep.subr.mxu0 0.0
    %195 = vmatpush1.msra.mxu0 0.0
    %196 = vmatprep.subr.mxu0 0.0
    %197 = vmatpush1.msra.mxu0 0.0
    %198 = vmatprep.subr.mxu0 0.0
    %199 = vmatpush1.msra.mxu0 0.0
    %200 = vmatprep.subr.mxu0 0.0
    %201 = vmatpush1.msra.mxu0 0.0
    %202 = vmatprep.subr.mxu0 0.0
    %203 = vmatpush1.msra.mxu0 0.0
    %204 = vmatprep.mubr.f32.mxu0 0.0
    %205 = vmatmul.mubr.f32.gmra.mrb[0].mxu0 %v135
    %v206 = vpop.f32.mrb[0].mxu0
    %v207 = vadd.f32 0.0, %v206
    %v208 = vpop.f32.mrb[0].mxu0
    %209 = vmatprep.mubr.f32.mxu0 0.0
    %210 = vmatmul.mubr.f32.gmra.mrb[0].mxu0 %v138
    %v211 = vpop.f32.mrb[0].mxu0
    %v212 = vadd.f32 0.0, %v211
    %v213 = vpop.f32.mrb[0].mxu0
    %214 = vdwg.mxu0
    %v215 = vlaneseq
    %v216 = vand.u32 %v215, 127
    %v217 = vmul.u32 %v65, 8
    %vm218 = vcmp.ge.s32.totalorder %v216, %v217
    %v219 = vadd.s32 %v217, 8
    %vm220 = vcmp.lt.s32.totalorder %v216, %v219
    %vm221 = vmand %vm218, %vm220
    %v223 = vlaneseq
    %v224 = vshrl.u32 %v223, 7
    %v225 = vsub.s32 0, %v224
    %v226 = vrot.slane %v29, %v225
    %v228 = vsel %vm221, %v226, 0.0
    %vm229 = vcmask 123904
    %v230 = vsel %vm229, %v228, 0.0
    %231 = vadd.xlane.f32.xlu0 %v230
    %v232 = vpop.xlane.xlu0 %231
    %v233 = vadd.f32 %v232, 1e-06
    %vm234 = vcmask 130048
    %v236 = vsel %vm234, %v228, 0
    %238 = vmatprep.subr.mxu0 0.0
    %239 = vmatpush1.msra.mxu0 %v207
    %240 = vmatprep.subr.mxu0 0.0
    %241 = vmatpush1.msra.mxu0 %v212
    %242 = vmatprep.subr.mxu0 0.0
    %243 = vmatpush1.msra.mxu0 0.0
    %244 = vmatprep.subr.mxu0 0.0
    %245 = vmatpush1.msra.mxu0 0.0
    %246 = vmatprep.subr.mxu0 0.0
    %247 = vmatpush1.msra.mxu0 0.0
    %248 = vmatprep.subr.mxu0 0.0
    %249 = vmatpush1.msra.mxu0 0.0
    %250 = vmatprep.subr.mxu0 0.0
    %251 = vmatpush1.msra.mxu0 0.0
    %252 = vmatprep.subr.mxu0 0.0
    %253 = vmatpush1.msra.mxu0 0.0
    %254 = vmatprep.subr.mxu0 0.0
    %255 = vmatpush1.msra.mxu0 0.0
    %256 = vmatprep.subr.mxu0 0.0
    %257 = vmatpush1.msra.mxu0 0.0
    %258 = vmatprep.subr.mxu0 0.0
    %259 = vmatpush1.msra.mxu0 0.0
    %260 = vmatprep.subr.mxu0 0.0
    %261 = vmatpush1.msra.mxu0 0.0
    %262 = vmatprep.subr.mxu0 0.0
    %263 = vmatpush1.msra.mxu0 0.0
    %264 = vmatprep.subr.mxu0 0.0
    %265 = vmatpush1.msra.mxu0 0.0
    %266 = vmatprep.subr.mxu0 0.0
    %267 = vmatpush1.msra.mxu0 0.0
    %268 = vmatprep.subr.mxu0 0.0
    %269 = vmatpush1.msra.mxu0 0.0
    %270 = vmatprep.subr.mxu0 0.0
    %271 = vmatpush1.msra.mxu0 0.0
    %272 = vmatprep.subr.mxu0 0.0
    %273 = vmatpush1.msra.mxu0 0.0
    %274 = vmatprep.subr.mxu0 0.0
    %275 = vmatpush1.msra.mxu0 0.0
    %276 = vmatprep.subr.mxu0 0.0
    %277 = vmatpush1.msra.mxu0 0.0
    %278 = vmatprep.subr.mxu0 0.0
    %279 = vmatpush1.msra.mxu0 0.0
    %280 = vmatprep.subr.mxu0 0.0
    %281 = vmatpush1.msra.mxu0 0.0
    %282 = vmatprep.subr.mxu0 0.0
    %283 = vmatpush1.msra.mxu0 0.0
    %284 = vmatprep.subr.mxu0 0.0
    %285 = vmatpush1.msra.mxu0 0.0
    %286 = vmatprep.subr.mxu0 0.0
    %287 = vmatpush1.msra.mxu0 0.0
    %288 = vmatprep.subr.mxu0 0.0
    %289 = vmatpush1.msra.mxu0 0.0
    %290 = vmatprep.subr.mxu0 0.0
    %291 = vmatpush1.msra.mxu0 0.0
    %292 = vmatprep.subr.mxu0 0.0
    %293 = vmatpush1.msra.mxu0 0.0
    %294 = vmatprep.subr.mxu0 0.0
    %295 = vmatpush1.msra.mxu0 0.0
    %296 = vmatprep.subr.mxu0 0.0
    %297 = vmatpush1.msra.mxu0 0.0
    %298 = vmatprep.subr.mxu0 0.0
    %299 = vmatpush1.msra.mxu0 0.0
    %300 = vmatprep.subr.mxu0 0.0
    %301 = vmatpush1.msra.mxu0 0.0
    %302 = vmatprep.mubr.f32.mxu0 0.0
    %303 = vmatmul.mubr.f32.gmra.mrb[0].mxu0 %v236
    %v304 = vpop.f32.mrb[0].mxu0
    %v305 = vadd.f32 0.0, %v304
    %v306 = vpop.f32.mrb[0].mxu0
    %307 = vdwg.mxu0
    %v308 = vrcp.pop %v233
    %v309 = vmul.f32 %v305, %v308
    %v310 = vlaneseq
    %v311 = vshrl.u32 %v310, 7
    %v312 = vsub.s32 0, %v311
    %v313 = vrot.slane %v57, %v312
    %vm314 = vcmask 261120
    %v316 = vsel %vm314, %v309, 0
    %318 = vmatprep.subr.mxu0 0.0
    %319 = vmatpush1.msra.mxu0 %v38
    %320 = vmatprep.subr.mxu0 0.0
    %321 = vmatpush1.msra.mxu0 %v39
    %322 = vmatprep.subr.mxu0 0.0
    %323 = vmatpush1.msra.mxu0 %v40
    %324 = vmatprep.subr.mxu0 0.0
    %325 = vmatpush1.msra.mxu0 %v41
    %326 = vmatprep.subr.mxu0 0.0
    %327 = vmatpush1.msra.mxu0 0.0
    %328 = vmatprep.subr.mxu0 0.0
    %329 = vmatpush1.msra.mxu0 0.0
    %330 = vmatprep.subr.mxu0 0.0
    %331 = vmatpush1.msra.mxu0 0.0
    %332 = vmatprep.subr.mxu0 0.0
    %333 = vmatpush1.msra.mxu0 0.0
    %334 = vmatprep.subr.mxu0 0.0
    %335 = vmatpush1.msra.mxu0 0.0
    %336 = vmatprep.subr.mxu0 0.0
    %337 = vmatpush1.msra.mxu0 0.0
    %338 = vmatprep.subr.mxu0 0.0
    %339 = vmatpush1.msra.mxu0 0.0
    %340 = vmatprep.subr.mxu0 0.0
    %341 = vmatpush1.msra.mxu0 0.0
    %342 = vmatprep.subr.mxu0 0.0
    %343 = vmatpush1.msra.mxu0 0.0
    %344 = vmatprep.subr.mxu0 0.0
    %345 = vmatpush1.msra.mxu0 0.0
    %346 = vmatprep.subr.mxu0 0.0
    %347 = vmatpush1.msra.mxu0 0.0
    %348 = vmatprep.subr.mxu0 0.0
    %349 = vmatpush1.msra.mxu0 0.0
    %350 = vmatprep.subr.mxu0 0.0
    %351 = vmatpush1.msra.mxu0 0.0
    %352 = vmatprep.subr.mxu0 0.0
    %353 = vmatpush1.msra.mxu0 0.0
    %354 = vmatprep.subr.mxu0 0.0
    %355 = vmatpush1.msra.mxu0 0.0
    %356 = vmatprep.subr.mxu0 0.0
    %357 = vmatpush1.msra.mxu0 0.0
    %358 = vmatprep.subr.mxu0 0.0
    %359 = vmatpush1.msra.mxu0 0.0
    %360 = vmatprep.subr.mxu0 0.0
    %361 = vmatpush1.msra.mxu0 0.0
    %362 = vmatprep.subr.mxu0 0.0
    %363 = vmatpush1.msra.mxu0 0.0
    %364 = vmatprep.subr.mxu0 0.0
    %365 = vmatpush1.msra.mxu0 0.0
    %366 = vmatprep.subr.mxu0 0.0
    %367 = vmatpush1.msra.mxu0 0.0
    %368 = vmatprep.subr.mxu0 0.0
    %369 = vmatpush1.msra.mxu0 0.0
    %370 = vmatprep.subr.mxu0 0.0
    %371 = vmatpush1.msra.mxu0 0.0
    %372 = vmatprep.subr.mxu0 0.0
    %373 = vmatpush1.msra.mxu0 0.0
    %374 = vmatprep.subr.mxu0 0.0
    %375 = vmatpush1.msra.mxu0 0.0
    %376 = vmatprep.subr.mxu0 0.0
    %377 = vmatpush1.msra.mxu0 0.0
    %378 = vmatprep.subr.mxu0 0.0
    %379 = vmatpush1.msra.mxu0 0.0
    %380 = vmatprep.subr.mxu0 0.0
    %381 = vmatpush1.msra.mxu0 0.0
    %382 = vmatprep.mubr.f32.mxu0 0.0
    %383 = vmatmul.mubr.f32.gmra.mrb[0].mxu0 %v316
    %v384 = vpop.f32.mrb[0].mxu0
    %v385 = vadd.f32 %v313, %v384
    %v386 = vpop.f32.mrb[0].mxu0
    %387 = vdwg.mxu0
    %v388 = vtanh.pop %v385
    %v389 = vmul.f32 %v388, %v388
    %vm390 = vcmask 254976
    %v391 = vsel %vm390, %v389, 0.0
    %392 = vadd.xlane.f32.xlu0 %v391
    %v393 = vpop.xlane.xlu0 %392
    %v394 = vmul.f32 %v54, %v54
    %v395 = vmul.f32 %v55, %v55
    %v396 = vsel %vm314, %v394, 0.0
    %397 = vadd.xlane.f32.xlu0 %v396
    %v398 = vpop.xlane.xlu0 %397
    %v399 = vsel %vm314, %v395, 0.0
    %400 = vadd.xlane.f32.xlu0 %v399
    %v401 = vpop.xlane.xlu0 %400
    %v403 = vsel %vm314, %v388, 0
    %v406 = vsel %vm314, %v54, 0
    %v409 = vsel %vm314, %v55, 0
    %411 = vmatprep.subr.mxu0 0.0
    %412 = vmatpush1.xpose.msra.mxu0 %v406
    %413 = vmatprep.subr.mxu0 0.0
    %414 = vmatpush1.xpose.msra.mxu0 %v409
    %415 = vmatprep.subr.mxu0 0.0
    %416 = vmatpush1.xpose.msra.mxu0 0.0
    %417 = vmatprep.subr.mxu0 0.0
    %418 = vmatpush1.xpose.msra.mxu0 0.0
    %419 = vmatprep.subr.mxu0 0.0
    %420 = vmatpush1.xpose.msra.mxu0 0.0
    %421 = vmatprep.subr.mxu0 0.0
    %422 = vmatpush1.xpose.msra.mxu0 0.0
    %423 = vmatprep.subr.mxu0 0.0
    %424 = vmatpush1.xpose.msra.mxu0 0.0
    %425 = vmatprep.subr.mxu0 0.0
    %426 = vmatpush1.xpose.msra.mxu0 0.0
    %427 = vmatprep.subr.mxu0 0.0
    %428 = vmatpush1.xpose.msra.mxu0 0.0
    %429 = vmatprep.subr.mxu0 0.0
    %430 = vmatpush1.xpose.msra.mxu0 0.0
    %431 = vmatprep.subr.mxu0 0.0
    %432 = vmatpush1.xpose.msra.mxu0 0.0
    %433 = vmatprep.subr.mxu0 0.0
    %434 = vmatpush1.xpose.msra.mxu0 0.0
    %435 = vmatprep.subr.mxu0 0.0
    %436 = vmatpush1.xpose.msra.mxu0 0.0
    %437 = vmatprep.subr.mxu0 0.0
    %438 = vmatpush1.xpose.msra.mxu0 0.0
    %439 = vmatprep.subr.mxu0 0.0
    %440 = vmatpush1.xpose.msra.mxu0 0.0
    %441 = vmatprep.subr.mxu0 0.0
    %442 = vmatpush1.xpose.msra.mxu0 0.0
    %443 = vmatprep.subr.mxu0 0.0
    %444 = vmatpush1.xpose.msra.mxu0 0.0
    %445 = vmatprep.subr.mxu0 0.0
    %446 = vmatpush1.xpose.msra.mxu0 0.0
    %447 = vmatprep.subr.mxu0 0.0
    %448 = vmatpush1.xpose.msra.mxu0 0.0
    %449 = vmatprep.subr.mxu0 0.0
    %450 = vmatpush1.xpose.msra.mxu0 0.0
    %451 = vmatprep.subr.mxu0 0.0
    %452 = vmatpush1.xpose.msra.mxu0 0.0
    %453 = vmatprep.subr.mxu0 0.0
    %454 = vmatpush1.xpose.msra.mxu0 0.0
    %455 = vmatprep.subr.mxu0 0.0
    %456 = vmatpush1.xpose.msra.mxu0 0.0
    %457 = vmatprep.subr.mxu0 0.0
    %458 = vmatpush1.xpose.msra.mxu0 0.0
    %459 = vmatprep.subr.mxu0 0.0
    %460 = vmatpush1.xpose.msra.mxu0 0.0
    %461 = vmatprep.subr.mxu0 0.0
    %462 = vmatpush1.xpose.msra.mxu0 0.0
    %463 = vmatprep.subr.mxu0 0.0
    %464 = vmatpush1.xpose.msra.mxu0 0.0
    %465 = vmatprep.subr.mxu0 0.0
    %466 = vmatpush1.xpose.msra.mxu0 0.0
    %467 = vmatprep.subr.mxu0 0.0
    %468 = vmatpush1.xpose.msra.mxu0 0.0
    %469 = vmatprep.subr.mxu0 0.0
    %470 = vmatpush1.xpose.msra.mxu0 0.0
    %471 = vmatprep.subr.mxu0 0.0
    %472 = vmatpush1.xpose.msra.mxu0 0.0
    %473 = vmatprep.subr.mxu0 0.0
    %474 = vmatpush1.xpose.msra.mxu0 0.0
    %475 = vmatprep.mubr.f32.mxu0 0.0
    %476 = vmatmul.mubr.f32.gmra.mrb[0].mxu0 %v403
    %v477 = vpop.f32.mrb[0].mxu0
    %v478 = vadd.f32 0.0, %v477
    %v479 = vpop.f32.mrb[0].mxu0
    %480 = vdwg.mxu0
    %v481 = vmul.f32 %v478, 2.0
    %v482 = vsub.f32 %v393, %v481
    %v485 = vlaneseq
    %v486 = vshrl.u32 %v485, 7
    %v487 = vsub.s32 %v216, %v486
    %v488 = vrot.slane %v398, %v487
    %v489 = vadd.s32 %v216, 4294967288
    %v490 = vlaneseq
    %v491 = vshrl.u32 %v490, 7
    %v492 = vsub.s32 %v489, %v491
    %v493 = vrot.slane %v401, %v492
    %vm494 = vcmask 130112
    %v495 = vsel %vm494, %v493, %v488
    %v497 = vadd.f32 %v482, %v495
    %v498 = vsel %vm229, %v497, inf
    %499 = vmin.xlane.f32.xlu0 %v498
    %v500 = vpop.xlane.xlu0 %499
    %vm501 = vcmp.eq.f32.partialorder %v497, %v500
    %v502 = vsel %vm501, %v216, 16
    %v503 = vsel %vm229, %v502, 2147483647
    %v504 = vand.u32 %v503, 65535
    %v505 = vshra.s32 %v503, 16
    %v506 = vcvt.s32.f32 %v504
    %v507 = vcvt.s32.f32 %v505
    %508 = vmin.xlane.f32.xlu0 %v507
    %v509 = vpop.xlane.xlu0 %508
    %vm510 = vcmp.eq.f32.partialorder %v507, %v509
    %v511 = vsel %vm510, %v506, inf
    %512 = vmin.xlane.f32.xlu0 %v511
    %v513 = vpop.xlane.xlu0 %512
    %v514 = vcvt.f32.s32 %v513
    %v515 = vcvt.f32.s32 %v509
    %v516 = vshll.u32 %v515, 16
    %v517 = vadd.s32 %v516, %v514
    %vm518 = vcmp.eq.s32.totalorder %v216, %v517
    %v519 = vsel %vm518, 1, 0
    %v520 = vcvt.s32.f32 %v519
    %v522 = vsel %vm234, %v520, 0
    %524 = vmatprep.subr.mxu0 0.0
    %525 = vmatpush1.msra.mxu0 %v54
    %526 = vmatprep.subr.mxu0 0.0
    %527 = vmatpush1.msra.mxu0 %v55
    %528 = vmatprep.subr.mxu0 0.0
    %529 = vmatpush1.msra.mxu0 0.0
    %530 = vmatprep.subr.mxu0 0.0
    %531 = vmatpush1.msra.mxu0 0.0
    %532 = vmatprep.subr.mxu0 0.0
    %533 = vmatpush1.msra.mxu0 0.0
    %534 = vmatprep.subr.mxu0 0.0
    %535 = vmatpush1.msra.mxu0 0.0
    %536 = vmatprep.subr.mxu0 0.0
    %537 = vmatpush1.msra.mxu0 0.0
    %538 = vmatprep.subr.mxu0 0.0
    %539 = vmatpush1.msra.mxu0 0.0
    %540 = vmatprep.subr.mxu0 0.0
    %541 = vmatpush1.msra.mxu0 0.0
    %542 = vmatprep.subr.mxu0 0.0
    %543 = vmatpush1.msra.mxu0 0.0
    %544 = vmatprep.subr.mxu0 0.0
    %545 = vmatpush1.msra.mxu0 0.0
    %546 = vmatprep.subr.mxu0 0.0
    %547 = vmatpush1.msra.mxu0 0.0
    %548 = vmatprep.subr.mxu0 0.0
    %549 = vmatpush1.msra.mxu0 0.0
    %550 = vmatprep.subr.mxu0 0.0
    %551 = vmatpush1.msra.mxu0 0.0
    %552 = vmatprep.subr.mxu0 0.0
    %553 = vmatpush1.msra.mxu0 0.0
    %554 = vmatprep.subr.mxu0 0.0
    %555 = vmatpush1.msra.mxu0 0.0
    %556 = vmatprep.subr.mxu0 0.0
    %557 = vmatpush1.msra.mxu0 0.0
    %558 = vmatprep.subr.mxu0 0.0
    %559 = vmatpush1.msra.mxu0 0.0
    %560 = vmatprep.subr.mxu0 0.0
    %561 = vmatpush1.msra.mxu0 0.0
    %562 = vmatprep.subr.mxu0 0.0
    %563 = vmatpush1.msra.mxu0 0.0
    %564 = vmatprep.subr.mxu0 0.0
    %565 = vmatpush1.msra.mxu0 0.0
    %566 = vmatprep.subr.mxu0 0.0
    %567 = vmatpush1.msra.mxu0 0.0
    %568 = vmatprep.subr.mxu0 0.0
    %569 = vmatpush1.msra.mxu0 0.0
    %570 = vmatprep.subr.mxu0 0.0
    %571 = vmatpush1.msra.mxu0 0.0
    %572 = vmatprep.subr.mxu0 0.0
    %573 = vmatpush1.msra.mxu0 0.0
    %574 = vmatprep.subr.mxu0 0.0
    %575 = vmatpush1.msra.mxu0 0.0
    %576 = vmatprep.subr.mxu0 0.0
    %577 = vmatpush1.msra.mxu0 0.0
    %578 = vmatprep.subr.mxu0 0.0
    %579 = vmatpush1.msra.mxu0 0.0
    %580 = vmatprep.subr.mxu0 0.0
    %581 = vmatpush1.msra.mxu0 0.0
    %582 = vmatprep.subr.mxu0 0.0
    %583 = vmatpush1.msra.mxu0 0.0
    %584 = vmatprep.subr.mxu0 0.0
    %585 = vmatpush1.msra.mxu0 0.0
    %586 = vmatprep.subr.mxu0 0.0
    %587 = vmatpush1.msra.mxu0 0.0
    %588 = vmatprep.mubr.f32.mxu0 0.0
    %589 = vmatmul.mubr.f32.gmra.mrb[0].mxu0 %v522
    %v590 = vpop.f32.mrb[0].mxu0
    %v591 = vadd.f32 0.0, %v590
    %v592 = vpop.f32.mrb[0].mxu0
    %593 = vdwg.mxu0
    %595 = vrot.lane.b32.xlu0 %v389, 96
    %v596 = vpop.permute.xlu0 %595
    %v598 = vsel %vm390, %v596, 0.0
    %599 = vadd.xlane.f32.xlu0 %v598
    %v600 = vpop.xlane.xlu0 %599
    %v601 = vmul.f32 %v56, %v56
    %v602 = vsel %vm314, %v601, 0.0
    %603 = vadd.xlane.f32.xlu0 %v602
    %v604 = vpop.xlane.xlu0 %603
    %605 = vrot.lane.b32.xlu0 %v388, 96
    %v606 = vpop.permute.xlu0 %605
    %v607 = vsel %vm314, %v606, 0
    %v610 = vsel %vm314, %v56, 0
    %612 = vmatprep.subr.mxu0 0.0
    %613 = vmatpush1.xpose.msra.mxu0 %v610
    %614 = vmatprep.subr.mxu0 0.0
    %615 = vmatpush1.xpose.msra.mxu0 0.0
    %616 = vmatprep.subr.mxu0 0.0
    %617 = vmatpush1.xpose.msra.mxu0 0.0
    %618 = vmatprep.subr.mxu0 0.0
    %619 = vmatpush1.xpose.msra.mxu0 0.0
    %620 = vmatprep.subr.mxu0 0.0
    %621 = vmatpush1.xpose.msra.mxu0 0.0
    %622 = vmatprep.subr.mxu0 0.0
    %623 = vmatpush1.xpose.msra.mxu0 0.0
    %624 = vmatprep.subr.mxu0 0.0
    %625 = vmatpush1.xpose.msra.mxu0 0.0
    %626 = vmatprep.subr.mxu0 0.0
    %627 = vmatpush1.xpose.msra.mxu0 0.0
    %628 = vmatprep.subr.mxu0 0.0
    %629 = vmatpush1.xpose.msra.mxu0 0.0
    %630 = vmatprep.subr.mxu0 0.0
    %631 = vmatpush1.xpose.msra.mxu0 0.0
    %632 = vmatprep.subr.mxu0 0.0
    %633 = vmatpush1.xpose.msra.mxu0 0.0
    %634 = vmatprep.subr.mxu0 0.0
    %635 = vmatpush1.xpose.msra.mxu0 0.0
    %636 = vmatprep.subr.mxu0 0.0
    %637 = vmatpush1.xpose.msra.mxu0 0.0
    %638 = vmatprep.subr.mxu0 0.0
    %639 = vmatpush1.xpose.msra.mxu0 0.0
    %640 = vmatprep.subr.mxu0 0.0
    %641 = vmatpush1.xpose.msra.mxu0 0.0
    %642 = vmatprep.subr.mxu0 0.0
    %643 = vmatpush1.xpose.msra.mxu0 0.0
    %644 = vmatprep.subr.mxu0 0.0
    %645 = vmatpush1.xpose.msra.mxu0 0.0
    %646 = vmatprep.subr.mxu0 0.0
    %647 = vmatpush1.xpose.msra.mxu0 0.0
    %648 = vmatprep.subr.mxu0 0.0
    %649 = vmatpush1.xpose.msra.mxu0 0.0
    %650 = vmatprep.subr.mxu0 0.0
    %651 = vmatpush1.xpose.msra.mxu0 0.0
    %652 = vmatprep.subr.mxu0 0.0
    %653 = vmatpush1.xpose.msra.mxu0 0.0
    %654 = vmatprep.subr.mxu0 0.0
    %655 = vmatpush1.xpose.msra.mxu0 0.0
    %656 = vmatprep.subr.mxu0 0.0
    %657 = vmatpush1.xpose.msra.mxu0 0.0
    %658 = vmatprep.subr.mxu0 0.0
    %659 = vmatpush1.xpose.msra.mxu0 0.0
    %660 = vmatprep.subr.mxu0 0.0
    %661 = vmatpush1.xpose.msra.mxu0 0.0
    %662 = vmatprep.subr.mxu0 0.0
    %663 = vmatpush1.xpose.msra.mxu0 0.0
    %664 = vmatprep.subr.mxu0 0.0
    %665 = vmatpush1.xpose.msra.mxu0 0.0
    %666 = vmatprep.subr.mxu0 0.0
    %667 = vmatpush1.xpose.msra.mxu0 0.0
    %668 = vmatprep.subr.mxu0 0.0
    %669 = vmatpush1.xpose.msra.mxu0 0.0
    %670 = vmatprep.subr.mxu0 0.0
    %671 = vmatpush1.xpose.msra.mxu0 0.0
    %672 = vmatprep.subr.mxu0 0.0
    %673 = vmatpush1.xpose.msra.mxu0 0.0
    %674 = vmatprep.subr.mxu0 0.0
    %675 = vmatpush1.xpose.msra.mxu0 0.0
    %676 = vmatprep.mubr.f32.mxu0 0.0
    %677 = vmatmul.mubr.f32.gmra.mrb[0].mxu0 %v607
    %v678 = vpop.f32.mrb[0].mxu0
    %v679 = vadd.f32 0.0, %v678
    %v680 = vpop.f32.mrb[0].mxu0
    %681 = vdwg.mxu0
    %v682 = vmul.f32 %v679, 2.0
    %v683 = vsub.f32 %v600, %v682
    %v685 = vlaneseq
    %v686 = vshrl.u32 %v685, 7
    %v687 = vsub.s32 %v216, %v686
    %v688 = vrot.slane %v604, %v687
    %v690 = vadd.f32 %v683, %v688
    %vm691 = vcmask 58368
    %v692 = vsel %vm691, %v690, inf
    %693 = vmin.xlane.f32.xlu0 %v692
    %v694 = vpop.xlane.xlu0 %693
    %vm695 = vcmp.eq.f32.partialorder %v690, %v694
    %v696 = vsel %vm695, %v216, 8
    %v697 = vsel %vm691, %v696, 2147483647
    %v698 = vand.u32 %v697, 65535
    %v699 = vshra.s32 %v697, 16
    %v700 = vcvt.s32.f32 %v698
    %v701 = vcvt.s32.f32 %v699
    %702 = vmin.xlane.f32.xlu0 %v701
    %v703 = vpop.xlane.xlu0 %702
    %vm704 = vcmp.eq.f32.partialorder %v701, %v703
    %v705 = vsel %vm704, %v700, inf
    %706 = vmin.xlane.f32.xlu0 %v705
    %v707 = vpop.xlane.xlu0 %706
    %v708 = vcvt.f32.s32 %v707
    %v709 = vcvt.f32.s32 %v703
    %v710 = vshll.u32 %v709, 16
    %v711 = vadd.s32 %v710, %v708
    %vm712 = vcmp.eq.s32.totalorder %v216, %v711
    %v713 = vsel %vm712, 1, 0
    %v714 = vcvt.s32.f32 %v713
    %vm715 = vcmask 64512
    %v717 = vsel %vm715, %v714, 0
    %719 = vmatprep.subr.mxu0 0.0
    %720 = vmatpush1.msra.mxu0 %v56
    %721 = vmatprep.subr.mxu0 0.0
    %722 = vmatpush1.msra.mxu0 0.0
    %723 = vmatprep.subr.mxu0 0.0
    %724 = vmatpush1.msra.mxu0 0.0
    %725 = vmatprep.subr.mxu0 0.0
    %726 = vmatpush1.msra.mxu0 0.0
    %727 = vmatprep.subr.mxu0 0.0
    %728 = vmatpush1.msra.mxu0 0.0
    %729 = vmatprep.subr.mxu0 0.0
    %730 = vmatpush1.msra.mxu0 0.0
    %731 = vmatprep.subr.mxu0 0.0
    %732 = vmatpush1.msra.mxu0 0.0
    %733 = vmatprep.subr.mxu0 0.0
    %734 = vmatpush1.msra.mxu0 0.0
    %735 = vmatprep.subr.mxu0 0.0
    %736 = vmatpush1.msra.mxu0 0.0
    %737 = vmatprep.subr.mxu0 0.0
    %738 = vmatpush1.msra.mxu0 0.0
    %739 = vmatprep.subr.mxu0 0.0
    %740 = vmatpush1.msra.mxu0 0.0
    %741 = vmatprep.subr.mxu0 0.0
    %742 = vmatpush1.msra.mxu0 0.0
    %743 = vmatprep.subr.mxu0 0.0
    %744 = vmatpush1.msra.mxu0 0.0
    %745 = vmatprep.subr.mxu0 0.0
    %746 = vmatpush1.msra.mxu0 0.0
    %747 = vmatprep.subr.mxu0 0.0
    %748 = vmatpush1.msra.mxu0 0.0
    %749 = vmatprep.subr.mxu0 0.0
    %750 = vmatpush1.msra.mxu0 0.0
    %751 = vmatprep.subr.mxu0 0.0
    %752 = vmatpush1.msra.mxu0 0.0
    %753 = vmatprep.subr.mxu0 0.0
    %754 = vmatpush1.msra.mxu0 0.0
    %755 = vmatprep.subr.mxu0 0.0
    %756 = vmatpush1.msra.mxu0 0.0
    %757 = vmatprep.subr.mxu0 0.0
    %758 = vmatpush1.msra.mxu0 0.0
    %759 = vmatprep.subr.mxu0 0.0
    %760 = vmatpush1.msra.mxu0 0.0
    %761 = vmatprep.subr.mxu0 0.0
    %762 = vmatpush1.msra.mxu0 0.0
    %763 = vmatprep.subr.mxu0 0.0
    %764 = vmatpush1.msra.mxu0 0.0
    %765 = vmatprep.subr.mxu0 0.0
    %766 = vmatpush1.msra.mxu0 0.0
    %767 = vmatprep.subr.mxu0 0.0
    %768 = vmatpush1.msra.mxu0 0.0
    %769 = vmatprep.subr.mxu0 0.0
    %770 = vmatpush1.msra.mxu0 0.0
    %771 = vmatprep.subr.mxu0 0.0
    %772 = vmatpush1.msra.mxu0 0.0
    %773 = vmatprep.subr.mxu0 0.0
    %774 = vmatpush1.msra.mxu0 0.0
    %775 = vmatprep.subr.mxu0 0.0
    %776 = vmatpush1.msra.mxu0 0.0
    %777 = vmatprep.subr.mxu0 0.0
    %778 = vmatpush1.msra.mxu0 0.0
    %779 = vmatprep.subr.mxu0 0.0
    %780 = vmatpush1.msra.mxu0 0.0
    %781 = vmatprep.subr.mxu0 0.0
    %782 = vmatpush1.msra.mxu0 0.0
    %783 = vmatprep.mubr.f32.mxu0 0.0
    %784 = vmatmul.mubr.f32.gmra.mrb[0].mxu0 %v717
    %v785 = vpop.f32.mrb[0].mxu0
    %v786 = vadd.f32 0.0, %v785
    %v787 = vpop.f32.mrb[0].mxu0
    %788 = vdwg.mxu0
    %v789 = vsub.f32 0.0, %v497
    %v790 = vsel %vm229, %v789, -inf
    %791 = vmax.xlane.f32.xlu0 %v790
    %v792 = vpop.xlane.xlu0 %791
    %v793 = vsub.f32 %v789, %v792
    %v794 = vmul.f32 %v793, 1.442695
    %v795 = vpow.pop %v794
    %v796 = vsel %vm229, %v795, 0.0
    %797 = vadd.xlane.f32.xlu0 %v796
    %v798 = vpop.xlane.xlu0 %797
    %v799 = vrcp.pop %v798
    %v800 = vmul.f32 %v795, %v799
    %v802 = vsub.f32 %v786, %v606
    %v803 = vmul.f32 %v802, %v802
    %v804 = vsel %vm390, %v803, 0.0
    %805 = vadd.xlane.f32.xlu0 %v804
    %v806 = vpop.xlane.xlu0 %805
    %v807 = vrot.slane %v806, 4
    %v808 = vadd.f32 %v806, %v807
    %v809 = vrot.slane %v808, 2
    %v810 = vadd.f32 %v808, %v809
    %v811 = vrot.slane %v810, 1
    %v812 = vadd.f32 %v810, %v811
    %s813 = vtos %v812
    %v814 = vrcp.pop 64.0
    %s815 = vtos %v814
    %s816 = smul.f32 %s813, %s815
    %s817 = smul.f32 %s816, 1.25
    %v818 = vstv %s817
    %v820 = vsel %vm314, %v786, 0
    %822 = vmatprep.subr.mxu0 0.0
    %823 = vmatpush1.msra.mxu0 %v50
    %824 = vmatprep.subr.mxu0 0.0
    %825 = vmatpush1.msra.mxu0 %v51
    %826 = vmatprep.subr.mxu0 0.0
    %827 = vmatpush1.msra.mxu0 %v52
    %828 = vmatprep.subr.mxu0 0.0
    %829 = vmatpush1.msra.mxu0 %v53
    %830 = vmatprep.subr.mxu0 0.0
    %831 = vmatpush1.msra.mxu0 0.0
    %832 = vmatprep.subr.mxu0 0.0
    %833 = vmatpush1.msra.mxu0 0.0
    %834 = vmatprep.subr.mxu0 0.0
    %835 = vmatpush1.msra.mxu0 0.0
    %836 = vmatprep.subr.mxu0 0.0
    %837 = vmatpush1.msra.mxu0 0.0
    %838 = vmatprep.subr.mxu0 0.0
    %839 = vmatpush1.msra.mxu0 0.0
    %840 = vmatprep.subr.mxu0 0.0
    %841 = vmatpush1.msra.mxu0 0.0
    %842 = vmatprep.subr.mxu0 0.0
    %843 = vmatpush1.msra.mxu0 0.0
    %844 = vmatprep.subr.mxu0 0.0
    %845 = vmatpush1.msra.mxu0 0.0
    %846 = vmatprep.subr.mxu0 0.0
    %847 = vmatpush1.msra.mxu0 0.0
    %848 = vmatprep.subr.mxu0 0.0
    %849 = vmatpush1.msra.mxu0 0.0
    %850 = vmatprep.subr.mxu0 0.0
    %851 = vmatpush1.msra.mxu0 0.0
    %852 = vmatprep.subr.mxu0 0.0
    %853 = vmatpush1.msra.mxu0 0.0
    %854 = vmatprep.subr.mxu0 0.0
    %855 = vmatpush1.msra.mxu0 0.0
    %856 = vmatprep.subr.mxu0 0.0
    %857 = vmatpush1.msra.mxu0 0.0
    %858 = vmatprep.subr.mxu0 0.0
    %859 = vmatpush1.msra.mxu0 0.0
    %860 = vmatprep.subr.mxu0 0.0
    %861 = vmatpush1.msra.mxu0 0.0
    %862 = vmatprep.subr.mxu0 0.0
    %863 = vmatpush1.msra.mxu0 0.0
    %864 = vmatprep.subr.mxu0 0.0
    %865 = vmatpush1.msra.mxu0 0.0
    %866 = vmatprep.subr.mxu0 0.0
    %867 = vmatpush1.msra.mxu0 0.0
    %868 = vmatprep.subr.mxu0 0.0
    %869 = vmatpush1.msra.mxu0 0.0
    %870 = vmatprep.subr.mxu0 0.0
    %871 = vmatpush1.msra.mxu0 0.0
    %872 = vmatprep.subr.mxu0 0.0
    %873 = vmatpush1.msra.mxu0 0.0
    %874 = vmatprep.subr.mxu0 0.0
    %875 = vmatpush1.msra.mxu0 0.0
    %876 = vmatprep.subr.mxu0 0.0
    %877 = vmatpush1.msra.mxu0 0.0
    %878 = vmatprep.subr.mxu0 0.0
    %879 = vmatpush1.msra.mxu0 0.0
    %880 = vmatprep.subr.mxu0 0.0
    %881 = vmatpush1.msra.mxu0 0.0
    %882 = vmatprep.subr.mxu0 0.0
    %883 = vmatpush1.msra.mxu0 0.0
    %884 = vmatprep.subr.mxu0 0.0
    %885 = vmatpush1.msra.mxu0 0.0
    %886 = vmatprep.mubr.f32.mxu0 0.0
    %887 = vmatmul.mubr.f32.gmra.mrb[0].mxu0 %v820
    %v888 = vpop.f32.mrb[0].mxu0
    %v889 = vadd.f32 0.0, %v888
    %v890 = vpop.f32.mrb[0].mxu0
    %891 = vdwg.mxu0
    %v893 = vsel %vm314, %v591, 0
    %895 = vmatprep.subr.mxu0 0.0
    %896 = vmatpush1.msra.mxu0 %v46
    %897 = vmatprep.subr.mxu0 0.0
    %898 = vmatpush1.msra.mxu0 %v47
    %899 = vmatprep.subr.mxu0 0.0
    %900 = vmatpush1.msra.mxu0 %v48
    %901 = vmatprep.subr.mxu0 0.0
    %902 = vmatpush1.msra.mxu0 %v49
    %903 = vmatprep.subr.mxu0 0.0
    %904 = vmatpush1.msra.mxu0 0.0
    %905 = vmatprep.subr.mxu0 0.0
    %906 = vmatpush1.msra.mxu0 0.0
    %907 = vmatprep.subr.mxu0 0.0
    %908 = vmatpush1.msra.mxu0 0.0
    %909 = vmatprep.subr.mxu0 0.0
    %910 = vmatpush1.msra.mxu0 0.0
    %911 = vmatprep.subr.mxu0 0.0
    %912 = vmatpush1.msra.mxu0 0.0
    %913 = vmatprep.subr.mxu0 0.0
    %914 = vmatpush1.msra.mxu0 0.0
    %915 = vmatprep.subr.mxu0 0.0
    %916 = vmatpush1.msra.mxu0 0.0
    %917 = vmatprep.subr.mxu0 0.0
    %918 = vmatpush1.msra.mxu0 0.0
    %919 = vmatprep.subr.mxu0 0.0
    %920 = vmatpush1.msra.mxu0 0.0
    %921 = vmatprep.subr.mxu0 0.0
    %922 = vmatpush1.msra.mxu0 0.0
    %923 = vmatprep.subr.mxu0 0.0
    %924 = vmatpush1.msra.mxu0 0.0
    %925 = vmatprep.subr.mxu0 0.0
    %926 = vmatpush1.msra.mxu0 0.0
    %927 = vmatprep.subr.mxu0 0.0
    %928 = vmatpush1.msra.mxu0 0.0
    %929 = vmatprep.subr.mxu0 0.0
    %930 = vmatpush1.msra.mxu0 0.0
    %931 = vmatprep.subr.mxu0 0.0
    %932 = vmatpush1.msra.mxu0 0.0
    %933 = vmatprep.subr.mxu0 0.0
    %934 = vmatpush1.msra.mxu0 0.0
    %935 = vmatprep.subr.mxu0 0.0
    %936 = vmatpush1.msra.mxu0 0.0
    %937 = vmatprep.subr.mxu0 0.0
    %938 = vmatpush1.msra.mxu0 0.0
    %939 = vmatprep.subr.mxu0 0.0
    %940 = vmatpush1.msra.mxu0 0.0
    %941 = vmatprep.subr.mxu0 0.0
    %942 = vmatpush1.msra.mxu0 0.0
    %943 = vmatprep.subr.mxu0 0.0
    %944 = vmatpush1.msra.mxu0 0.0
    %945 = vmatprep.subr.mxu0 0.0
    %946 = vmatpush1.msra.mxu0 0.0
    %947 = vmatprep.subr.mxu0 0.0
    %948 = vmatpush1.msra.mxu0 0.0
    %949 = vmatprep.subr.mxu0 0.0
    %950 = vmatpush1.msra.mxu0 0.0
    %951 = vmatprep.subr.mxu0 0.0
    %952 = vmatpush1.msra.mxu0 0.0
    %953 = vmatprep.subr.mxu0 0.0
    %954 = vmatpush1.msra.mxu0 0.0
    %955 = vmatprep.subr.mxu0 0.0
    %956 = vmatpush1.msra.mxu0 0.0
    %957 = vmatprep.subr.mxu0 0.0
    %958 = vmatpush1.msra.mxu0 0.0
    %959 = vmatprep.mubr.f32.mxu0 0.0
    %960 = vmatmul.mubr.f32.gmra.mrb[0].mxu0 %v893
    %v961 = vpop.f32.mrb[0].mxu0
    %v962 = vadd.f32 %v889, %v961
    %v963 = vpop.f32.mrb[0].mxu0
    %964 = vdwg.mxu0
    %v965 = vlaneseq
    %v966 = vshrl.u32 %v965, 7
    %v967 = vsub.s32 0, %v966
    %v968 = vrot.slane %v58, %v967
    %v969 = vadd.f32 %v962, %v968
    %v970 = vmul.u32 %v216, 8
    %vm971 = vcmp.ge.s32.totalorder %v65, %v970
    %vm972 = vcmp.ge.s32.totalorder %v66, %v970
    %v973 = vadd.s32 %v970, 8
    %vm974 = vcmp.lt.s32.totalorder %v65, %v973
    %vm975 = vcmp.lt.s32.totalorder %v66, %v973
    %vm976 = vmand %vm971, %vm974
    %vm977 = vmand %vm972, %vm975
    %v978 = vsel %vm976, 1, 0
    %v979 = vsel %vm977, 1, 0
    %v980 = vcvt.s32.f32 %v978
    %v981 = vcvt.s32.f32 %v979
    %vm982 = vcmask 15360
    %v984 = vsel %vm982, %v980, 0
    %v987 = vsel %vm982, %v981, 0
    %vm989 = vcmask 1041408
    %v991 = vsel %vm989, %v969, 0
    %993 = vmatprep.subr.mxu0 0.0
    %994 = vmatpush1.msra.mxu0 %v991
    %995 = vmatprep.subr.mxu0 0.0
    %996 = vmatpush1.msra.mxu0 0.0
    %997 = vmatprep.subr.mxu0 0.0
    %998 = vmatpush1.msra.mxu0 0.0
    %999 = vmatprep.subr.mxu0 0.0
    %1000 = vmatpush1.msra.mxu0 0.0
    %1001 = vmatprep.subr.mxu0 0.0
    %1002 = vmatpush1.msra.mxu0 0.0
    %1003 = vmatprep.subr.mxu0 0.0
    %1004 = vmatpush1.msra.mxu0 0.0
    %1005 = vmatprep.subr.mxu0 0.0
    %1006 = vmatpush1.msra.mxu0 0.0
    %1007 = vmatprep.subr.mxu0 0.0
    %1008 = vmatpush1.msra.mxu0 0.0
    %1009 = vmatprep.subr.mxu0 0.0
    %1010 = vmatpush1.msra.mxu0 0.0
    %1011 = vmatprep.subr.mxu0 0.0
    %1012 = vmatpush1.msra.mxu0 0.0
    %1013 = vmatprep.subr.mxu0 0.0
    %1014 = vmatpush1.msra.mxu0 0.0
    %1015 = vmatprep.subr.mxu0 0.0
    %1016 = vmatpush1.msra.mxu0 0.0
    %1017 = vmatprep.subr.mxu0 0.0
    %1018 = vmatpush1.msra.mxu0 0.0
    %1019 = vmatprep.subr.mxu0 0.0
    %1020 = vmatpush1.msra.mxu0 0.0
    %1021 = vmatprep.subr.mxu0 0.0
    %1022 = vmatpush1.msra.mxu0 0.0
    %1023 = vmatprep.subr.mxu0 0.0
    %1024 = vmatpush1.msra.mxu0 0.0
    %1025 = vmatprep.subr.mxu0 0.0
    %1026 = vmatpush1.msra.mxu0 0.0
    %1027 = vmatprep.subr.mxu0 0.0
    %1028 = vmatpush1.msra.mxu0 0.0
    %1029 = vmatprep.subr.mxu0 0.0
    %1030 = vmatpush1.msra.mxu0 0.0
    %1031 = vmatprep.subr.mxu0 0.0
    %1032 = vmatpush1.msra.mxu0 0.0
    %1033 = vmatprep.subr.mxu0 0.0
    %1034 = vmatpush1.msra.mxu0 0.0
    %1035 = vmatprep.subr.mxu0 0.0
    %1036 = vmatpush1.msra.mxu0 0.0
    %1037 = vmatprep.subr.mxu0 0.0
    %1038 = vmatpush1.msra.mxu0 0.0
    %1039 = vmatprep.subr.mxu0 0.0
    %1040 = vmatpush1.msra.mxu0 0.0
    %1041 = vmatprep.subr.mxu0 0.0
    %1042 = vmatpush1.msra.mxu0 0.0
    %1043 = vmatprep.subr.mxu0 0.0
    %1044 = vmatpush1.msra.mxu0 0.0
    %1045 = vmatprep.subr.mxu0 0.0
    %1046 = vmatpush1.msra.mxu0 0.0
    %1047 = vmatprep.subr.mxu0 0.0
    %1048 = vmatpush1.msra.mxu0 0.0
    %1049 = vmatprep.subr.mxu0 0.0
    %1050 = vmatpush1.msra.mxu0 0.0
    %1051 = vmatprep.subr.mxu0 0.0
    %1052 = vmatpush1.msra.mxu0 0.0
    %1053 = vmatprep.subr.mxu0 0.0
    %1054 = vmatpush1.msra.mxu0 0.0
    %1055 = vmatprep.subr.mxu0 0.0
    %1056 = vmatpush1.msra.mxu0 0.0
    %1057 = vmatprep.mubr.f32.mxu0 0.0
    %1058 = vmatmul.mubr.f32.gmra.mrb[0].mxu0 %v984
    %v1059 = vpop.f32.mrb[0].mxu0
    %v1060 = vadd.f32 0.0, %v1059
    %v1061 = vpop.f32.mrb[0].mxu0
    %1062 = vmatprep.mubr.f32.mxu0 0.0
    %1063 = vmatmul.mubr.f32.gmra.mrb[0].mxu0 %v987
    %v1064 = vpop.f32.mrb[0].mxu0
    %v1065 = vadd.f32 0.0, %v1064
    %v1066 = vpop.f32.mrb[0].mxu0
    %1067 = vdwg.mxu0
    %v1069 = vsel %vm314, %v207, 0
    %v1072 = vsel %vm314, %v212, 0
    %1074 = vmatprep.subr.mxu0 0.0
    %1075 = vmatpush1.msra.mxu0 %v42
    %1076 = vmatprep.subr.mxu0 0.0
    %1077 = vmatpush1.msra.mxu0 %v43
    %1078 = vmatprep.subr.mxu0 0.0
    %1079 = vmatpush1.msra.mxu0 %v44
    %1080 = vmatprep.subr.mxu0 0.0
    %1081 = vmatpush1.msra.mxu0 %v45
    %1082 = vmatprep.subr.mxu0 0.0
    %1083 = vmatpush1.msra.mxu0 0.0
    %1084 = vmatprep.subr.mxu0 0.0
    %1085 = vmatpush1.msra.mxu0 0.0
    %1086 = vmatprep.subr.mxu0 0.0
    %1087 = vmatpush1.msra.mxu0 0.0
    %1088 = vmatprep.subr.mxu0 0.0
    %1089 = vmatpush1.msra.mxu0 0.0
    %1090 = vmatprep.subr.mxu0 0.0
    %1091 = vmatpush1.msra.mxu0 0.0
    %1092 = vmatprep.subr.mxu0 0.0
    %1093 = vmatpush1.msra.mxu0 0.0
    %1094 = vmatprep.subr.mxu0 0.0
    %1095 = vmatpush1.msra.mxu0 0.0
    %1096 = vmatprep.subr.mxu0 0.0
    %1097 = vmatpush1.msra.mxu0 0.0
    %1098 = vmatprep.subr.mxu0 0.0
    %1099 = vmatpush1.msra.mxu0 0.0
    %1100 = vmatprep.subr.mxu0 0.0
    %1101 = vmatpush1.msra.mxu0 0.0
    %1102 = vmatprep.subr.mxu0 0.0
    %1103 = vmatpush1.msra.mxu0 0.0
    %1104 = vmatprep.subr.mxu0 0.0
    %1105 = vmatpush1.msra.mxu0 0.0
    %1106 = vmatprep.subr.mxu0 0.0
    %1107 = vmatpush1.msra.mxu0 0.0
    %1108 = vmatprep.subr.mxu0 0.0
    %1109 = vmatpush1.msra.mxu0 0.0
    %1110 = vmatprep.subr.mxu0 0.0
    %1111 = vmatpush1.msra.mxu0 0.0
    %1112 = vmatprep.subr.mxu0 0.0
    %1113 = vmatpush1.msra.mxu0 0.0
    %1114 = vmatprep.subr.mxu0 0.0
    %1115 = vmatpush1.msra.mxu0 0.0
    %1116 = vmatprep.subr.mxu0 0.0
    %1117 = vmatpush1.msra.mxu0 0.0
    %1118 = vmatprep.subr.mxu0 0.0
    %1119 = vmatpush1.msra.mxu0 0.0
    %1120 = vmatprep.subr.mxu0 0.0
    %1121 = vmatpush1.msra.mxu0 0.0
    %1122 = vmatprep.subr.mxu0 0.0
    %1123 = vmatpush1.msra.mxu0 0.0
    %1124 = vmatprep.subr.mxu0 0.0
    %1125 = vmatpush1.msra.mxu0 0.0
    %1126 = vmatprep.subr.mxu0 0.0
    %1127 = vmatpush1.msra.mxu0 0.0
    %1128 = vmatprep.subr.mxu0 0.0
    %1129 = vmatpush1.msra.mxu0 0.0
    %1130 = vmatprep.subr.mxu0 0.0
    %1131 = vmatpush1.msra.mxu0 0.0
    %1132 = vmatprep.subr.mxu0 0.0
    %1133 = vmatpush1.msra.mxu0 0.0
    %1134 = vmatprep.subr.mxu0 0.0
    %1135 = vmatpush1.msra.mxu0 0.0
    %1136 = vmatprep.subr.mxu0 0.0
    %1137 = vmatpush1.msra.mxu0 0.0
    %1138 = vmatprep.mubr.f32.mxu0 0.0
    %1139 = vmatmul.mubr.f32.gmra.mrb[0].mxu0 %v1069
    %v1140 = vpop.f32.mrb[0].mxu0
    %v1141 = vadd.f32 %v1060, %v1140
    %v1142 = vpop.f32.mrb[0].mxu0
    %1143 = vmatprep.mubr.f32.mxu0 0.0
    %1144 = vmatmul.mubr.f32.gmra.mrb[0].mxu0 %v1072
    %v1145 = vpop.f32.mrb[0].mxu0
    %v1146 = vadd.f32 %v1065, %v1145
    %v1147 = vpop.f32.mrb[0].mxu0
    %1148 = vdwg.mxu0
    %v1149 = vtanh.pop %v1141
    %v1150 = vtanh.pop %v1146
    %v1151 = vlaneseq
    %v1152 = vshrl.u32 %v1151, 7
    %v1153 = vsub.s32 0, %v1152
    %v1154 = vrot.slane %v63, %v1153
    %v1156 = vsel %vm314, %v1149, 0
    %v1159 = vsel %vm314, %v1150, 0
    %1161 = vmatprep.subr.mxu0 0.0
    %1162 = vmatpush1.msra.mxu0 %v59
    %1163 = vmatprep.subr.mxu0 0.0
    %1164 = vmatpush1.msra.mxu0 %v60
    %1165 = vmatprep.subr.mxu0 0.0
    %1166 = vmatpush1.msra.mxu0 %v61
    %1167 = vmatprep.subr.mxu0 0.0
    %1168 = vmatpush1.msra.mxu0 %v62
    %1169 = vmatprep.subr.mxu0 0.0
    %1170 = vmatpush1.msra.mxu0 0.0
    %1171 = vmatprep.subr.mxu0 0.0
    %1172 = vmatpush1.msra.mxu0 0.0
    %1173 = vmatprep.subr.mxu0 0.0
    %1174 = vmatpush1.msra.mxu0 0.0
    %1175 = vmatprep.subr.mxu0 0.0
    %1176 = vmatpush1.msra.mxu0 0.0
    %1177 = vmatprep.subr.mxu0 0.0
    %1178 = vmatpush1.msra.mxu0 0.0
    %1179 = vmatprep.subr.mxu0 0.0
    %1180 = vmatpush1.msra.mxu0 0.0
    %1181 = vmatprep.subr.mxu0 0.0
    %1182 = vmatpush1.msra.mxu0 0.0
    %1183 = vmatprep.subr.mxu0 0.0
    %1184 = vmatpush1.msra.mxu0 0.0
    %1185 = vmatprep.subr.mxu0 0.0
    %1186 = vmatpush1.msra.mxu0 0.0
    %1187 = vmatprep.subr.mxu0 0.0
    %1188 = vmatpush1.msra.mxu0 0.0
    %1189 = vmatprep.subr.mxu0 0.0
    %1190 = vmatpush1.msra.mxu0 0.0
    %1191 = vmatprep.subr.mxu0 0.0
    %1192 = vmatpush1.msra.mxu0 0.0
    %1193 = vmatprep.subr.mxu0 0.0
    %1194 = vmatpush1.msra.mxu0 0.0
    %1195 = vmatprep.subr.mxu0 0.0
    %1196 = vmatpush1.msra.mxu0 0.0
    %1197 = vmatprep.subr.mxu0 0.0
    %1198 = vmatpush1.msra.mxu0 0.0
    %1199 = vmatprep.subr.mxu0 0.0
    %1200 = vmatpush1.msra.mxu0 0.0
    %1201 = vmatprep.subr.mxu0 0.0
    %1202 = vmatpush1.msra.mxu0 0.0
    %1203 = vmatprep.subr.mxu0 0.0
    %1204 = vmatpush1.msra.mxu0 0.0
    %1205 = vmatprep.subr.mxu0 0.0
    %1206 = vmatpush1.msra.mxu0 0.0
    %1207 = vmatprep.subr.mxu0 0.0
    %1208 = vmatpush1.msra.mxu0 0.0
    %1209 = vmatprep.subr.mxu0 0.0
    %1210 = vmatpush1.msra.mxu0 0.0
    %1211 = vmatprep.subr.mxu0 0.0
    %1212 = vmatpush1.msra.mxu0 0.0
    %1213 = vmatprep.subr.mxu0 0.0
    %1214 = vmatpush1.msra.mxu0 0.0
    %1215 = vmatprep.subr.mxu0 0.0
    %1216 = vmatpush1.msra.mxu0 0.0
    %1217 = vmatprep.subr.mxu0 0.0
    %1218 = vmatpush1.msra.mxu0 0.0
    %1219 = vmatprep.subr.mxu0 0.0
    %1220 = vmatpush1.msra.mxu0 0.0
    %1221 = vmatprep.subr.mxu0 0.0
    %1222 = vmatpush1.msra.mxu0 0.0
    %1223 = vmatprep.subr.mxu0 0.0
    %1224 = vmatpush1.msra.mxu0 0.0
    %1225 = vmatprep.mubr.f32.mxu0 0.0
    %1226 = vmatmul.mubr.f32.gmra.mrb[0].mxu0 %v1156
    %v1227 = vpop.f32.mrb[0].mxu0
    %v1228 = vadd.f32 %v1154, %v1227
    %v1229 = vpop.f32.mrb[0].mxu0
    %1230 = vmatprep.mubr.f32.mxu0 0.0
    %1231 = vmatmul.mubr.f32.gmra.mrb[0].mxu0 %v1159
    %v1232 = vpop.f32.mrb[0].mxu0
    %v1233 = vadd.f32 %v1154, %v1232
    %v1234 = vpop.f32.mrb[0].mxu0
    %1235 = vdwg.mxu0
    %1236 = vst [vmem:[%s3] sm:$0xff] %v1228
    %1237 = vst [vmem:[%s3 + $0x8] sm:$0xff] %v1233
    %1238 = vst [vmem:[%s3 + $0x10] sm:$0xff] 0.0
    %1239 = vst.msk [vmem:[%s3 + $0x10] sm:$0x3] %vm390, %v388
    %vm1240 = vcmask 517376
    %1241 = vst.msk [vmem:[%s3 + $0x10] sm:$0x3] %vm1240, %v388
    %1243 = vrot.lane.b32.xlu0 %v800, 64
    %v1244 = vpop.permute.xlu0 %1243
    %vm1246 = vcmask 648704
    %1247 = vst.msk [vmem:[%s3 + $0x10] sm:$0x3] %vm1246, %v1244
    %vm1248 = vcmask 656000
    %1249 = vst.msk [vmem:[%s3 + $0x10] sm:$0x1] %vm1248, %v818
    // Predicated region
    $region18: #{forward.1} parent=1 // pred_check
      _
    $region19: #{forward.1} parent=1 // pred_check_branch
      %1251 = sbr.rel (0) target = $region21
    $region20: #{forward.1} parent=1 // pred_region
      _
    $region21: #{forward.1} parent=1 // pred_fallthru
      _
    // Predicated region
    $region22: #{forward.1} parent=1 // pred_check
      _
    $region23: #{forward.1} parent=1 // pred_check_branch
      %1253 = sbr.rel (0) target = $region25
    $region24: #{forward.1} parent=1 // pred_region
      _
    $region25: #{forward.1} parent=1 // pred_fallthru
      _
    %1254 = vsyncpa [#allocation3], 1

</llo_original>
